<compile_context>
chip_gen: v5e
topology: v5e:2x2
jax: 0.10.0
libtpu: 0.0.40
codegen_flags: <defaults>
</compile_context>

<pallas_src>
import functools

import jax
import jax.numpy as jnp
from jax.experimental import pallas as pl
from jax.experimental.pallas import tpu as pltpu


_NEG_BIG = -1e30  # masked-logit sentinel (kept in f32 everywhere)


def set2set_kernel(node_ref, seg_ref, wh_ref, wr_ref, b_ref,
                   woq_ref, wor_ref, bo_ref, out_ref,
                   h_scr, c_scr, qbf_scr, r_scr, m_scr, l_scr, acc_scr,
                   *, b_block):
    i = pl.program_id(1)                 # set2set step index
    k = pl.program_id(2)                 # node-tile index
    last_i = pl.num_programs(1) - 1
    last_k = pl.num_programs(2) - 1

    # ---- start of a B-block: q_star = 0, (h, c) = 0 ----
    @pl.when(jnp.logical_and(i == 0, k == 0))
    def _():
        h_scr[...] = jnp.zeros_like(h_scr)
        c_scr[...] = jnp.zeros_like(c_scr)
        r_scr[...] = jnp.zeros_like(r_scr)

    # ---- start of a set2set step: LSTM cell + reset online-softmax state ----
    @pl.when(k == 0)
    def _():
        h = h_scr[...]
        c = c_scr[...]
        r_prev = r_scr[...]

        # gates = q_star @ W_ih^T + h @ W_hh^T + b  with q_star = [q_prev, r_prev],
        # q_prev == h (1-layer, seq-len-1 LSTM), so W_ih^T[:d] is folded into wh in
        # the wrapper.  Weights are pre-split per gate -> lane-aligned (d,d) matmuls.
        def gate(j):
            return (jnp.dot(h, wh_ref[j], preferred_element_type=jnp.float32)
                    + jnp.dot(r_prev, wr_ref[j], preferred_element_type=jnp.float32)
                    + b_ref[j])

        i_g = jax.nn.sigmoid(gate(0))
        f_g = jax.nn.sigmoid(gate(1))
        g_g = jnp.tanh(gate(2))
        o_g = jax.nn.sigmoid(gate(3))
        c_new = f_g * c + i_g * g_g
        h_new = o_g * jnp.tanh(c_new)
        c_scr[...] = c_new
        h_scr[...] = h_new
        qbf_scr[...] = h_new.astype(jnp.bfloat16)      # q == h, cached once per step
        # reset flash-softmax accumulators for this step
        m_scr[...] = jnp.full_like(m_scr, _NEG_BIG)
        l_scr[...] = jnp.zeros_like(l_scr)
        acc_scr[...] = jnp.zeros_like(acc_scr)

    # ---- online segment-softmax accumulation over this node tile ----
    q_bf = qbf_scr[...]                                           # [Bblk, d] bf16
    node = node_ref[...]                                          # [TN, d]   bf16
    # s[b, n] = q_b . node_n   (bf16 operands, f32 accumulation on the MXU)
    s = jax.lax.dot_general(q_bf, node, (((1,), (1,)), ((), ())),
                            preferred_element_type=jnp.float32)   # [Bblk, TN]
    base = pl.program_id(0) * b_block                             # global graph id base
    row_id = jax.lax.broadcasted_iota(jnp.int32, s.shape, 0) + base
    mask = seg_ref[...] == row_id                                 # graph membership
    smask = jnp.where(mask, s, _NEG_BIG)
    m_tile = jnp.max(smask, axis=1, keepdims=True)                # [Bblk, 1]
    m_new = jnp.maximum(m_scr[...], m_tile)
    alpha = jnp.exp(m_scr[...] - m_new)
    p = jnp.where(mask, jnp.exp(smask - m_new), 0.0)              # hardened vs sentinel
    l_scr[...] = alpha * l_scr[...] + jnp.sum(p, axis=1, keepdims=True)
    acc_scr[...] = alpha * acc_scr[...] + jnp.dot(
        p.astype(jnp.bfloat16), node, preferred_element_type=jnp.float32)
    m_scr[...] = m_new

    # ---- end of a set2set step: finalize r = softmax-weighted node sum ----
    @pl.when(k == last_k)
    def _():
        inv = pl.reciprocal(l_scr[...] + 1e-6, approx=True)
        r_scr[...] = acc_scr[...] * inv

    # ---- final step: out = W_o([q, r]) + b_o (split + lane-padded weights) ----
    @pl.when(jnp.logical_and(i == last_i, k == last_k))
    def _():
        out = (jnp.dot(h_scr[...], woq_ref[...], preferred_element_type=jnp.float32)
               + jnp.dot(r_scr[...], wor_ref[...], preferred_element_type=jnp.float32)
               + bo_ref[...])
        out_ref[...] = out.astype(out_ref.dtype)


def graph_readout(node, node_num, params, *, step=4, tn=512, b_block=None,
                  resident_budget_bytes=8 << 20):
    """Set2Set readout.  node: [N, d] f32, node_num: [B] int32 nodes-per-graph."""
    N, d = node.shape
    B = int(node_num.shape[0])
    D_out = max(128, -(-d // 128) * 128)           # lane-dense output slab

    # ---- node tiling: resident when the bf16 node tensor fits the VMEM budget ----
    tn = max(128, -(-tn // 128) * 128)
    N_res = max(128, -(-N // 128) * 128)
    resident = (N_res * d * 2) <= resident_budget_bytes
    if resident:
        tn_eff = N_pad = N_res                     # one tile, DMAed exactly once
    else:
        tn_eff = tn
        N_pad = max(tn_eff, -(-N // tn_eff) * tn_eff)
    kt = N_pad // tn_eff

    # ---- batch padding / B-block parallel axis (2 TensorCores on v7x) ----
    B_pad = max(16, -(-B // 16) * 16)              # 16 sublanes: native bf16 LHS layout
    if b_block is None:
        b_block = 128 if (resident and B_pad > 128) else B_pad
    b_block = max(16, min(-(-b_block // 16) * 16, B_pad))
    B_pad = -(-B_pad // b_block) * b_block
    n_bblk = B_pad // b_block

    # ---- inputs ----
    # per-node graph id (replaces a dense [B, N] one-hot mask); padded nodes -> -1
    seg = jnp.repeat(jnp.arange(B, dtype=jnp.int32), node_num,
                     total_repeat_length=N)
    seg = jnp.pad(seg, (0, N_pad - N), constant_values=-1).reshape(1, N_pad)
    node_bf = jnp.pad(node.astype(jnp.float32),
                      ((0, N_pad - N), (0, 0))).astype(jnp.bfloat16)

    # ---- parameters ----
    wih = params["wih"].astype(jnp.float32)        # [2d, 4d]  (weight_ih_l0^T)
    whh = params["whh"].astype(jnp.float32)        # [d, 4d]   (weight_hh_l0^T)
    b_l = params["b_lstm"].astype(jnp.float32).reshape(1, 4 * d)
    wo = params["wo"].astype(jnp.float32)          # [2d, d]   (W_o.weight^T)
    b_o = params["b_o"].astype(jnp.float32).reshape(1, d)

    w_h = wih[:d] + whh                            # fold W_ih^T[:d] into W_hh^T (q == h)
    w_r = wih[d:]
    # per-gate column blocks -> lane-aligned gate matmuls, no [B,4d] slicing in-kernel
    wh4 = jnp.stack([w_h[:, j * d:(j + 1) * d] for j in range(4)], axis=0)   # [4,d,d]
    wr4 = jnp.stack([w_r[:, j * d:(j + 1) * d] for j in range(4)], axis=0)   # [4,d,d]
    b4 = jnp.stack([b_l[:, j * d:(j + 1) * d] for j in range(4)], axis=0)    # [4,1,d]

    wo_q = jnp.pad(wo[:d], ((0, 0), (0, D_out - d)))
    wo_r = jnp.pad(wo[d:], ((0, 0), (0, D_out - d)))
    b_o_p = jnp.pad(b_o, ((0, 0), (0, D_out - d)))

    # ---- VMEM / cost bookkeeping ----
    wbytes = (8 * d * d + 2 * d * D_out + 4 * d + D_out) * 4
    vmem_need = (2 * tn_eff * d * 2                # node (bf16), double-buffered
                 + 2 * tn_eff * 4                  # seg (int32), double-buffered
                 + 2 * wbytes                      # resident weights, double-buffered
                 + 2 * b_block * D_out * 4         # output block, double-buffered
                 + b_block * (4 * d + 2) * 4       # f32 scratch (h, c, r, acc, m, l)
                 + b_block * d * 2)                # bf16 q scratch
    vmem_limit = int(min(max(vmem_need + (8 << 20), 32 << 20), 64 << 20))

    node_passes = 1 if resident else step * n_bblk
    cost = pl.CostEstimate(
        flops=int(step * (4 * B_pad * N_pad * d + 16 * B_pad * d * d)
                  + 4 * B_pad * d * D_out),
        transcendentals=int(step * B_pad * (N_pad + 6 * d)),
        bytes_accessed=int(node_passes * (N_pad * d * 2 + N_pad * 4)
                           + wbytes + B_pad * D_out * 4))

    kernel = functools.partial(set2set_kernel, b_block=b_block)

    out = pl.pallas_call(
        kernel,
        out_shape=jax.ShapeDtypeStruct((B_pad, D_out), jnp.float32),
        grid_spec=pltpu.PrefetchScalarGridSpec(
            num_scalar_prefetch=0,
            grid=(n_bblk, step, kt),
            in_specs=[
                pl.BlockSpec((tn_eff, d), lambda b, i, k: (k, 0)),     # node tile (bf16)
                pl.BlockSpec((1, tn_eff), lambda b, i, k: (0, k)),     # graph ids (int32)
                pl.BlockSpec((4, d, d), lambda b, i, k: (0, 0, 0)),    # wh (per gate)
                pl.BlockSpec((4, d, d), lambda b, i, k: (0, 0, 0)),    # wr (per gate)
                pl.BlockSpec((4, 1, d), lambda b, i, k: (0, 0, 0)),    # lstm bias (per gate)
                pl.BlockSpec((d, D_out), lambda b, i, k: (0, 0)),      # wo_q (lane-padded)
                pl.BlockSpec((d, D_out), lambda b, i, k: (0, 0)),      # wo_r (lane-padded)
                pl.BlockSpec((1, D_out), lambda b, i, k: (0, 0)),      # b_o  (lane-padded)
            ],
            out_specs=pl.BlockSpec((b_block, D_out), lambda b, i, k: (b, 0)),
            scratch_shapes=[
                pltpu.VMEM((b_block, d), jnp.float32),    # h
                pltpu.VMEM((b_block, d), jnp.float32),    # c
                pltpu.VMEM((b_block, d), jnp.bfloat16),   # q (bf16, cached per step)
                pltpu.VMEM((b_block, d), jnp.float32),    # r (previous step / result)
                pltpu.VMEM((b_block, 1), jnp.float32),    # running max m
                pltpu.VMEM((b_block, 1), jnp.float32),    # running denom l
                pltpu.VMEM((b_block, d), jnp.float32),    # running numerator acc
            ]),
        compiler_params=pltpu.CompilerParams(
            dimension_semantics=("parallel", "arbitrary", "arbitrary"),
            vmem_limit_bytes=vmem_limit),
        cost_estimate=cost,
    )(node_bf, seg, wh4, wr4, b4, wo_q, wo_r, b_o_p)

    return out[:B, :d]


def graph_readout_ref(node, node_num, params, *, step=4):
    """Pure-JAX f32 reference with the original module's semantics."""
    N, d = node.shape
    B = node_num.shape[0]
    seg = jnp.repeat(jnp.arange(B), node_num, total_repeat_length=N)
    maskb = seg[None, :] == jnp.arange(B)[:, None]        # [B, N]
    q_star = jnp.zeros((B, 2 * d), jnp.float32)
    h = jnp.zeros((B, d), jnp.float32)
    c = jnp.zeros((B, d), jnp.float32)
    for _ in range(step):
        gates = q_star @ params["wih"] + h @ params["whh"] + params["b_lstm"]
        i_g = jax.nn.sigmoid(gates[:, 0:d])
        f_g = jax.nn.sigmoid(gates[:, d:2 * d])
        g_g = jnp.tanh(gates[:, 2 * d:3 * d])
        o_g = jax.nn.sigmoid(gates[:, 3 * d:4 * d])
        c = f_g * c + i_g * g_g
        h = o_g * jnp.tanh(c)
        q = h
        s = jnp.einsum("bd,nd->bn", q, node)
        smask = jnp.where(maskb, s, _NEG_BIG)
        m = jnp.max(smask, axis=1, keepdims=True)
        ee = jnp.where(maskb, jnp.exp(smask - m), 0.0)
        a = ee / (jnp.sum(ee, axis=1, keepdims=True) + 1e-6)
        r = a @ node
        q_star = jnp.concatenate([q, r], axis=-1)
    return q_star @ params["wo"] + params["b_o"]


def make_params(key, d_model):
    """Deterministic synthetic parameters (xavier-normal weights, small biases)."""
    k1, k2, k3, k4, k5 = jax.random.split(key, 5)

    def xavier(k, fan_in, fan_out):
        std = (2.0 / (fan_in + fan_out)) ** 0.5
        return (std * jax.random.normal(k, (fan_in, fan_out))).astype(jnp.float32)

    d = d_model
    return {
        "wih": xavier(k1, 2 * d, 4 * d),                                          # weight_ih_l0^T
        "whh": xavier(k2, d, 4 * d),                                              # weight_hh_l0^T
        "b_lstm": (0.1 * jax.random.normal(k3, (1, 4 * d))).astype(jnp.float32),  # b_ih + b_hh
        "wo": xavier(k4, 2 * d, d),                                               # W_o.weight^T
        "b_o": (0.1 * jax.random.normal(k5, (1, d))).astype(jnp.float32),
    }


if __name__ == "__main__":
    d_model = 32
    step = 4
    node_num_py = [5, 3]                   # nodes per graph (static)
    B = len(node_num_py)
    N = sum(node_num_py)
    node_num = jnp.array(node_num_py, dtype=jnp.int32)

    key = jax.random.PRNGKey(0)
    k_node, k_param = jax.random.split(key)

    node = jax.random.normal(k_node, (N, d_model), dtype=jnp.float32)
    params = make_params(k_param, d_model)

    out = graph_readout(node, node_num, params, step=step)
    out = jax.block_until_ready(out)

    ref = graph_readout_ref(node, node_num, params, step=step)
    assert out.shape == (B, d_model)
    # bf16 node matmuls + approx reciprocal in the kernel vs pure-f32 reference.
    assert jnp.allclose(out, ref, rtol=2e-2, atol=2e-2), "mismatch vs reference"

    print("KERNEL_OK")
</pallas_src>

<mosaic_0001>
module attributes {stable_mosaic.version = 11 : i64} {
  func.func @set2set_kernel(%arg0: i32, %arg1: i32, %arg2: i32, %arg3: memref<128x32xbf16, #tpu.memory_space<vmem>>, %arg4: memref<1x128xi32, #tpu.memory_space<vmem>>, %arg5: memref<4x32x32xf32, #tpu.memory_space<vmem>>, %arg6: memref<4x32x32xf32, #tpu.memory_space<vmem>>, %arg7: memref<4x1x32xf32, #tpu.memory_space<vmem>>, %arg8: memref<32x128xf32, #tpu.memory_space<vmem>>, %arg9: memref<32x128xf32, #tpu.memory_space<vmem>>, %arg10: memref<1x128xf32, #tpu.memory_space<vmem>>, %arg11: memref<16x128xf32, #tpu.memory_space<vmem>>, %arg12: memref<16x32xf32, #tpu.memory_space<vmem>>, %arg13: memref<16x32xf32, #tpu.memory_space<vmem>>, %arg14: memref<16x32xbf16, #tpu.memory_space<vmem>>, %arg15: memref<16x32xf32, #tpu.memory_space<vmem>>, %arg16: memref<16x1xf32, #tpu.memory_space<vmem>>, %arg17: memref<16x1xf32, #tpu.memory_space<vmem>>, %arg18: memref<16x32xf32, #tpu.memory_space<vmem>>) attributes {dimension_semantics = [#tpu.dimension_semantics<parallel>, #tpu.dimension_semantics<arbitrary>, #tpu.dimension_semantics<arbitrary>], iteration_bounds = array<i64: 1, 4, 1>, scalar_prefetch = 0 : i64, scratch_operands = 7 : i64, tpu.core_type = #tpu.core_type<tc>, window_params = [{transform_indices = @transform_0, window_bounds = array<i64: 128, 32>}, {transform_indices = @transform_1, window_bounds = array<i64: 1, 128>}, {pipeline_mode = #tpu.pipeline_mode<synchronous>, transform_indices = @transform_2, window_bounds = array<i64: 4, 32, 32>}, {pipeline_mode = #tpu.pipeline_mode<synchronous>, transform_indices = @transform_3, window_bounds = array<i64: 4, 32, 32>}, {pipeline_mode = #tpu.pipeline_mode<synchronous>, transform_indices = @transform_4, window_bounds = array<i64: 4, 1, 32>}, {pipeline_mode = #tpu.pipeline_mode<synchronous>, transform_indices = @transform_5, window_bounds = array<i64: 32, 128>}, {pipeline_mode = #tpu.pipeline_mode<synchronous>, transform_indices = @transform_6, window_bounds = array<i64: 32, 128>}, {pipeline_mode = #tpu.pipeline_mode<synchronous>, transform_indices = @transform_7, window_bounds = array<i64: 1, 128>}, {transform_indices = @transform_8, window_bounds = array<i64: 16, 128>}]} {
    %c0_i32 = arith.constant 0 : i32
    %0 = arith.cmpi eq, %arg1, %c0_i32 : i32
    %c0_i32_0 = arith.constant 0 : i32
    %1 = arith.cmpi eq, %arg2, %c0_i32_0 : i32
    %2 = arith.andi %0, %1 : i1
    %3 = arith.extui %2 : i1 to i32
    %c0_i32_1 = arith.constant 0 : i32
    %4 = arith.cmpi ne, %3, %c0_i32_1 : i32
    scf.if %4 {
      %cst_32 = arith.constant 0.000000e+00 : f32
      %54 = vector.broadcast %cst_32 : f32 to vector<16x32xf32>
      %c0_33 = arith.constant 0 : index
      %c0_34 = arith.constant 0 : index
      %55 = vector.load %arg12[%c0_33, %c0_34] : memref<16x32xf32, #tpu.memory_space<vmem>>, vector<16x32xf32>
      tpu.vector_store %arg12[%c0_33, %c0_34], %54 {strides = array<i32>} : memref<16x32xf32, #tpu.memory_space<vmem>>, vector<16x32xf32>,
      %cst_35 = arith.constant 0.000000e+00 : f32
      %56 = vector.broadcast %cst_35 : f32 to vector<16x32xf32>
      %c0_36 = arith.constant 0 : index
      %c0_37 = arith.constant 0 : index
      %57 = vector.load %arg13[%c0_36, %c0_37] : memref<16x32xf32, #tpu.memory_space<vmem>>, vector<16x32xf32>
      tpu.vector_store %arg13[%c0_36, %c0_37], %56 {strides = array<i32>} : memref<16x32xf32, #tpu.memory_space<vmem>>, vector<16x32xf32>,
      %cst_38 = arith.constant 0.000000e+00 : f32
      %58 = vector.broadcast %cst_38 : f32 to vector<16x32xf32>
      %c0_39 = arith.constant 0 : index
      %c0_40 = arith.constant 0 : index
      %59 = vector.load %arg15[%c0_39, %c0_40] : memref<16x32xf32, #tpu.memory_space<vmem>>, vector<16x32xf32>
      tpu.vector_store %arg15[%c0_39, %c0_40], %58 {strides = array<i32>} : memref<16x32xf32, #tpu.memory_space<vmem>>, vector<16x32xf32>,
    } else {
    }
    %c0_i32_2 = arith.constant 0 : i32
    %5 = arith.cmpi eq, %arg2, %c0_i32_2 : i32
    %6 = arith.extui %5 : i1 to i32
    %c0_i32_3 = arith.constant 0 : i32
    %7 = arith.cmpi ne, %6, %c0_i32_3 : i32
    scf.if %7 {
      %c0_32 = arith.constant 0 : index
      %c0_33 = arith.constant 0 : index
      %54 = vector.load %arg12[%c0_32, %c0_33] : memref<16x32xf32, #tpu.memory_space<vmem>>, vector<16x32xf32>
      %c0_34 = arith.constant 0 : index
      %c0_35 = arith.constant 0 : index
      %55 = vector.load %arg13[%c0_34, %c0_35] : memref<16x32xf32, #tpu.memory_space<vmem>>, vector<16x32xf32>
      %c0_36 = arith.constant 0 : index
      %c0_37 = arith.constant 0 : index
      %56 = vector.load %arg15[%c0_36, %c0_37] : memref<16x32xf32, #tpu.memory_space<vmem>>, vector<16x32xf32>
      %c0_38 = arith.constant 0 : index
      %c0_39 = arith.constant 0 : index
      %c0_40 = arith.constant 0 : index
      %57 = vector.load %arg5[%c0_38, %c0_39, %c0_40] : memref<4x32x32xf32, #tpu.memory_space<vmem>>, vector<1x32x32xf32>
      %58 = vector.shape_cast %57 : vector<1x32x32xf32> to vector<32x32xf32>
      %cst_41 = arith.constant dense<0.000000e+00> : vector<16x32xf32>
      %59 = tpu.matmul %54, %58, %cst_41 {dimension_numbers = #tpu.dot_dimension_numbers<[1], [0], [0], [1], [0, 0, 1, 1], [], []>} : vector<16x32xf32>, vector<32x32xf32>, vector<16x32xf32> -> vector<16x32xf32>
      %c0_42 = arith.constant 0 : index
      %c0_43 = arith.constant 0 : index
      %c0_44 = arith.constant 0 : index
      %60 = vector.load %arg6[%c0_42, %c0_43, %c0_44] : memref<4x32x32xf32, #tpu.memory_space<vmem>>, vector<1x32x32xf32>
      %61 = vector.shape_cast %60 : vector<1x32x32xf32> to vector<32x32xf32>
      %cst_45 = arith.constant dense<0.000000e+00> : vector<16x32xf32>
      %62 = tpu.matmul %56, %61, %cst_45 {dimension_numbers = #tpu.dot_dimension_numbers<[1], [0], [0], [1], [0, 0, 1, 1], [], []>} : vector<16x32xf32>, vector<32x32xf32>, vector<16x32xf32> -> vector<16x32xf32>
      %63 = arith.addf %59, %62 : vector<16x32xf32>
      %c0_46 = arith.constant 0 : index
      %c0_47 = arith.constant 0 : index
      %c0_48 = arith.constant 0 : index
      %64 = vector.load %arg7[%c0_46, %c0_47, %c0_48] : memref<4x1x32xf32, #tpu.memory_space<vmem>>, vector<1x1x32xf32>
      %65 = vector.shape_cast %64 : vector<1x1x32xf32> to vector<1x32xf32>
      %66 = vector.broadcast %65 : vector<1x32xf32> to vector<16x32xf32>
      %67 = arith.addf %63, %66 : vector<16x32xf32>
      %68 = arith.negf %67 : vector<16x32xf32>
      %69 = math.exp %68 : vector<16x32xf32>
      %cst_49 = arith.constant 1.000000e+00 : f32
      %70 = vector.broadcast %cst_49 : f32 to vector<16x32xf32>
      %71 = arith.addf %70, %69 : vector<16x32xf32>
      %72 = arith.divf %70, %71 : vector<16x32xf32>
      %c1 = arith.constant 1 : index
      %c0_50 = arith.constant 0 : index
      %c0_51 = arith.constant 0 : index
      %73 = vector.load %arg5[%c1, %c0_50, %c0_51] : memref<4x32x32xf32, #tpu.memory_space<vmem>>, vector<1x32x32xf32>
      %74 = vector.shape_cast %73 : vector<1x32x32xf32> to vector<32x32xf32>
      %cst_52 = arith.constant dense<0.000000e+00> : vector<16x32xf32>
      %75 = tpu.matmul %54, %74, %cst_52 {dimension_numbers = #tpu.dot_dimension_numbers<[1], [0], [0], [1], [0, 0, 1, 1], [], []>} : vector<16x32xf32>, vector<32x32xf32>, vector<16x32xf32> -> vector<16x32xf32>
      %c1_53 = arith.constant 1 : index
      %c0_54 = arith.constant 0 : index
      %c0_55 = arith.constant 0 : index
      %76 = vector.load %arg6[%c1_53, %c0_54, %c0_55] : memref<4x32x32xf32, #tpu.memory_space<vmem>>, vector<1x32x32xf32>
      %77 = vector.shape_cast %76 : vector<1x32x32xf32> to vector<32x32xf32>
      %cst_56 = arith.constant dense<0.000000e+00> : vector<16x32xf32>
      %78 = tpu.matmul %56, %77, %cst_56 {dimension_numbers = #tpu.dot_dimension_numbers<[1], [0], [0], [1], [0, 0, 1, 1], [], []>} : vector<16x32xf32>, vector<32x32xf32>, vector<16x32xf32> -> vector<16x32xf32>
      %79 = arith.addf %75, %78 : vector<16x32xf32>
      %c1_57 = arith.constant 1 : index
      %c0_58 = arith.constant 0 : index
      %c0_59 = arith.constant 0 : index
      %80 = vector.load %arg7[%c1_57, %c0_58, %c0_59] : memref<4x1x32xf32, #tpu.memory_space<vmem>>, vector<1x1x32xf32>
      %81 = vector.shape_cast %80 : vector<1x1x32xf32> to vector<1x32xf32>
      %82 = vector.broadcast %81 : vector<1x32xf32> to vector<16x32xf32>
      %83 = arith.addf %79, %82 : vector<16x32xf32>
      %84 = arith.negf %83 : vector<16x32xf32>
      %85 = math.exp %84 : vector<16x32xf32>
      %cst_60 = arith.constant 1.000000e+00 : f32
      %86 = vector.broadcast %cst_60 : f32 to vector<16x32xf32>
      %87 = arith.addf %86, %85 : vector<16x32xf32>
      %88 = arith.divf %86, %87 : vector<16x32xf32>
      %c2 = arith.constant 2 : index
      %c0_61 = arith.constant 0 : index
      %c0_62 = arith.constant 0 : index
      %89 = vector.load %arg5[%c2, %c0_61, %c0_62] : memref<4x32x32xf32, #tpu.memory_space<vmem>>, vector<1x32x32xf32>
      %90 = vector.shape_cast %89 : vector<1x32x32xf32> to vector<32x32xf32>
      %cst_63 = arith.constant dense<0.000000e+00> : vector<16x32xf32>
      %91 = tpu.matmul %54, %90, %cst_63 {dimension_numbers = #tpu.dot_dimension_numbers<[1], [0], [0], [1], [0, 0, 1, 1], [], []>} : vector<16x32xf32>, vector<32x32xf32>, vector<16x32xf32> -> vector<16x32xf32>
      %c2_64 = arith.constant 2 : index
      %c0_65 = arith.constant 0 : index
      %c0_66 = arith.constant 0 : index
      %92 = vector.load %arg6[%c2_64, %c0_65, %c0_66] : memref<4x32x32xf32, #tpu.memory_space<vmem>>, vector<1x32x32xf32>
      %93 = vector.shape_cast %92 : vector<1x32x32xf32> to vector<32x32xf32>
      %cst_67 = arith.constant dense<0.000000e+00> : vector<16x32xf32>
      %94 = tpu.matmul %56, %93, %cst_67 {dimension_numbers = #tpu.dot_dimension_numbers<[1], [0], [0], [1], [0, 0, 1, 1], [], []>} : vector<16x32xf32>, vector<32x32xf32>, vector<16x32xf32> -> vector<16x32xf32>
      %95 = arith.addf %91, %94 : vector<16x32xf32>
      %c2_68 = arith.constant 2 : index
      %c0_69 = arith.constant 0 : index
      %c0_70 = arith.constant 0 : index
      %96 = vector.load %arg7[%c2_68, %c0_69, %c0_70] : memref<4x1x32xf32, #tpu.memory_space<vmem>>, vector<1x1x32xf32>
      %97 = vector.shape_cast %96 : vector<1x1x32xf32> to vector<1x32xf32>
      %98 = vector.broadcast %97 : vector<1x32xf32> to vector<16x32xf32>
      %99 = arith.addf %95, %98 : vector<16x32xf32>
      %100 = math.tanh %99 : vector<16x32xf32>
      %c3 = arith.constant 3 : index
      %c0_71 = arith.constant 0 : index
      %c0_72 = arith.constant 0 : index
      %101 = vector.load %arg5[%c3, %c0_71, %c0_72] : memref<4x32x32xf32, #tpu.memory_space<vmem>>, vector<1x32x32xf32>
      %102 = vector.shape_cast %101 : vector<1x32x32xf32> to vector<32x32xf32>
      %cst_73 = arith.constant dense<0.000000e+00> : vector<16x32xf32>
      %103 = tpu.matmul %54, %102, %cst_73 {dimension_numbers = #tpu.dot_dimension_numbers<[1], [0], [0], [1], [0, 0, 1, 1], [], []>} : vector<16x32xf32>, vector<32x32xf32>, vector<16x32xf32> -> vector<16x32xf32>
      %c3_74 = arith.constant 3 : index
      %c0_75 = arith.constant 0 : index
      %c0_76 = arith.constant 0 : index
      %104 = vector.load %arg6[%c3_74, %c0_75, %c0_76] : memref<4x32x32xf32, #tpu.memory_space<vmem>>, vector<1x32x32xf32>
      %105 = vector.shape_cast %104 : vector<1x32x32xf32> to vector<32x32xf32>
      %cst_77 = arith.constant dense<0.000000e+00> : vector<16x32xf32>
      %106 = tpu.matmul %56, %105, %cst_77 {dimension_numbers = #tpu.dot_dimension_numbers<[1], [0], [0], [1], [0, 0, 1, 1], [], []>} : vector<16x32xf32>, vector<32x32xf32>, vector<16x32xf32> -> vector<16x32xf32>
      %107 = arith.addf %103, %106 : vector<16x32xf32>
      %c3_78 = arith.constant 3 : index
      %c0_79 = arith.constant 0 : index
      %c0_80 = arith.constant 0 : index
      %108 = vector.load %arg7[%c3_78, %c0_79, %c0_80] : memref<4x1x32xf32, #tpu.memory_space<vmem>>, vector<1x1x32xf32>
      %109 = vector.shape_cast %108 : vector<1x1x32xf32> to vector<1x32xf32>
      %110 = vector.broadcast %109 : vector<1x32xf32> to vector<16x32xf32>
      %111 = arith.addf %107, %110 : vector<16x32xf32>
      %112 = arith.negf %111 : vector<16x32xf32>
      %113 = math.exp %112 : vector<16x32xf32>
      %cst_81 = arith.constant 1.000000e+00 : f32
      %114 = vector.broadcast %cst_81 : f32 to vector<16x32xf32>
      %115 = arith.addf %114, %113 : vector<16x32xf32>
      %116 = arith.divf %114, %115 : vector<16x32xf32>
      %117 = arith.mulf %88, %55 : vector<16x32xf32>
      %118 = arith.mulf %72, %100 : vector<16x32xf32>
      %119 = arith.addf %117, %118 : vector<16x32xf32>
      %120 = math.tanh %119 : vector<16x32xf32>
      %121 = arith.mulf %116, %120 : vector<16x32xf32>
      %c0_82 = arith.constant 0 : index
      %c0_83 = arith.constant 0 : index
      %122 = vector.load %arg13[%c0_82, %c0_83] : memref<16x32xf32, #tpu.memory_space<vmem>>, vector<16x32xf32>
      tpu.vector_store %arg13[%c0_82, %c0_83], %119 {strides = array<i32>} : memref<16x32xf32, #tpu.memory_space<vmem>>, vector<16x32xf32>,
      %c0_84 = arith.constant 0 : index
      %c0_85 = arith.constant 0 : index
      %123 = vector.load %arg12[%c0_84, %c0_85] : memref<16x32xf32, #tpu.memory_space<vmem>>, vector<16x32xf32>
      tpu.vector_store %arg12[%c0_84, %c0_85], %121 {strides = array<i32>} : memref<16x32xf32, #tpu.memory_space<vmem>>, vector<16x32xf32>,
      %124 = arith.truncf %121 : vector<16x32xf32> to vector<16x32xbf16>
      %c0_86 = arith.constant 0 : index
      %c0_87 = arith.constant 0 : index
      %125 = vector.load %arg14[%c0_86, %c0_87] : memref<16x32xbf16, #tpu.memory_space<vmem>>, vector<16x32xbf16>
      tpu.vector_store %arg14[%c0_86, %c0_87], %124 {strides = array<i32>} : memref<16x32xbf16, #tpu.memory_space<vmem>>, vector<16x32xbf16>,
      %cst_88 = arith.constant -1.000000e+30 : f32
      %126 = vector.broadcast %cst_88 : f32 to vector<16x1xf32>
      %c0_89 = arith.constant 0 : index
      %c0_90 = arith.constant 0 : index
      %127 = vector.load %arg16[%c0_89, %c0_90] : memref<16x1xf32, #tpu.memory_space<vmem>>, vector<16x1xf32>
      tpu.vector_store %arg16[%c0_89, %c0_90], %126 {strides = array<i32>} : memref<16x1xf32, #tpu.memory_space<vmem>>, vector<16x1xf32>,
      %cst_91 = arith.constant 0.000000e+00 : f32
      %128 = vector.broadcast %cst_91 : f32 to vector<16x1xf32>
      %c0_92 = arith.constant 0 : index
      %c0_93 = arith.constant 0 : index
      %129 = vector.load %arg17[%c0_92, %c0_93] : memref<16x1xf32, #tpu.memory_space<vmem>>, vector<16x1xf32>
      tpu.vector_store %arg17[%c0_92, %c0_93], %128 {strides = array<i32>} : memref<16x1xf32, #tpu.memory_space<vmem>>, vector<16x1xf32>,
      %cst_94 = arith.constant 0.000000e+00 : f32
      %130 = vector.broadcast %cst_94 : f32 to vector<16x32xf32>
      %c0_95 = arith.constant 0 : index
      %c0_96 = arith.constant 0 : index
      %131 = vector.load %arg18[%c0_95, %c0_96] : memref<16x32xf32, #tpu.memory_space<vmem>>, vector<16x32xf32>
      tpu.vector_store %arg18[%c0_95, %c0_96], %130 {strides = array<i32>} : memref<16x32xf32, #tpu.memory_space<vmem>>, vector<16x32xf32>,
    } else {
    }
    %c0 = arith.constant 0 : index
    %c0_4 = arith.constant 0 : index
    %8 = vector.load %arg14[%c0, %c0_4] : memref<16x32xbf16, #tpu.memory_space<vmem>>, vector<16x32xbf16>
    %c0_5 = arith.constant 0 : index
    %c0_6 = arith.constant 0 : index
    %9 = vector.load %arg3[%c0_5, %c0_6] : memref<128x32xbf16, #tpu.memory_space<vmem>>, vector<128x32xbf16>
    %cst = arith.constant dense<0.000000e+00> : vector<16x128xf32>
    %10 = tpu.matmul %8, %9, %cst {dimension_numbers = #tpu.dot_dimension_numbers<[1], [1], [0], [0], [0, 0, 1, 0], [], []>} : vector<16x32xbf16>, vector<128x32xbf16>, vector<16x128xf32> -> vector<16x128xf32>
    %c16_i32 = arith.constant 16 : i32
    %11 = arith.muli %arg0, %c16_i32 : i32
    %12 = tpu.iota {dimensions = array<i32: 0>} : vector<16x128xi32>
    %13 = vector.broadcast %11 : i32 to vector<16x128xi32>
    %14 = arith.addi %12, %13 : vector<16x128xi32>
    %c0_7 = arith.constant 0 : index
    %c0_8 = arith.constant 0 : index
    %15 = vector.load %arg4[%c0_7, %c0_8] : memref<1x128xi32, #tpu.memory_space<vmem>>, vector<1x128xi32>
    %16 = vector.broadcast %15 : vector<1x128xi32> to vector<16x128xi32>
    %17 = arith.cmpi eq, %16, %14 : vector<16x128xi32>
    %cst_9 = arith.constant -1.000000e+30 : f32
    %18 = vector.broadcast %cst_9 : f32 to vector<16x128xf32>
    %19 = arith.select %17, %10, %18 : vector<16x128xi1>, vector<16x128xf32>
    %cst_10 = arith.constant dense<0xFF800000> : vector<16xf32>
    %20 = vector.multi_reduction <maximumf>, %19, %cst_10 [1] : vector<16x128xf32> to vector<16xf32>
    %21 = vector.shape_cast %20 : vector<16xf32> to vector<16x1xf32>
    %c0_11 = arith.constant 0 : index
    %c0_12 = arith.constant 0 : index
    %22 = vector.load %arg16[%c0_11, %c0_12] : memref<16x1xf32, #tpu.memory_space<vmem>>, vector<16x1xf32>
    %23 = arith.maximumf %22, %21 : vector<16x1xf32>
    %c0_13 = arith.constant 0 : index
    %c0_14 = arith.constant 0 : index
    %24 = vector.load %arg16[%c0_13, %c0_14] : memref<16x1xf32, #tpu.memory_space<vmem>>, vector<16x1xf32>
    %25 = arith.subf %24, %23 : vector<16x1xf32>
    %26 = math.exp %25 : vector<16x1xf32>
    %27 = vector.broadcast %23 : vector<16x1xf32> to vector<16x128xf32>
    %28 = arith.subf %19, %27 : vector<16x128xf32>
    %29 = math.exp %28 : vector<16x128xf32>
    %cst_15 = arith.constant 0.000000e+00 : f32
    %30 = vector.broadcast %cst_15 : f32 to vector<16x128xf32>
    %31 = arith.select %17, %29, %30 : vector<16x128xi1>, vector<16x128xf32>
    %c0_16 = arith.constant 0 : index
    %c0_17 = arith.constant 0 : index
    %32 = vector.load %arg17[%c0_16, %c0_17] : memref<16x1xf32, #tpu.memory_space<vmem>>, vector<16x1xf32>
    %33 = arith.mulf %26, %32 : vector<16x1xf32>
    %cst_18 = arith.constant dense<0.000000e+00> : vector<16xf32>
    %34 = vector.multi_reduction <add>, %31, %cst_18 [1] : vector<16x128xf32> to vector<16xf32>
    %35 = vector.shape_cast %34 : vector<16xf32> to vector<16x1xf32>
    %36 = arith.addf %33, %35 : vector<16x1xf32>
    %c0_19 = arith.constant 0 : index
    %c0_20 = arith.constant 0 : index
    %37 = vector.load %arg17[%c0_19, %c0_20] : memref<16x1xf32, #tpu.memory_space<vmem>>, vector<16x1xf32>
    tpu.vector_store %arg17[%c0_19, %c0_20], %36 {strides = array<i32>} : memref<16x1xf32, #tpu.memory_space<vmem>>, vector<16x1xf32>,
    %c0_21 = arith.constant 0 : index
    %c0_22 = arith.constant 0 : index
    %38 = vector.load %arg18[%c0_21, %c0_22] : memref<16x32xf32, #tpu.memory_space<vmem>>, vector<16x32xf32>
    %39 = vector.broadcast %26 : vector<16x1xf32> to vector<16x32xf32>
    %40 = arith.mulf %39, %38 : vector<16x32xf32>
    %41 = arith.truncf %31 : vector<16x128xf32> to vector<16x128xbf16>
    %cst_23 = arith.constant dense<0.000000e+00> : vector<16x32xf32>
    %42 = tpu.matmul %41, %9, %cst_23 {dimension_numbers = #tpu.dot_dimension_numbers<[1], [0], [0], [1], [0, 0, 1, 1], [], []>} : vector<16x128xbf16>, vector<128x32xbf16>, vector<16x32xf32> -> vector<16x32xf32>
    %43 = arith.addf %40, %42 : vector<16x32xf32>
    %c0_24 = arith.constant 0 : index
    %c0_25 = arith.constant 0 : index
    %44 = vector.load %arg18[%c0_24, %c0_25] : memref<16x32xf32, #tpu.memory_space<vmem>>, vector<16x32xf32>
    tpu.vector_store %arg18[%c0_24, %c0_25], %43 {strides = array<i32>} : memref<16x32xf32, #tpu.memory_space<vmem>>, vector<16x32xf32>,
    %c0_26 = arith.constant 0 : index
    %c0_27 = arith.constant 0 : index
    %45 = vector.load %arg16[%c0_26, %c0_27] : memref<16x1xf32, #tpu.memory_space<vmem>>, vector<16x1xf32>
    tpu.vector_store %arg16[%c0_26, %c0_27], %23 {strides = array<i32>} : memref<16x1xf32, #tpu.memory_space<vmem>>, vector<16x1xf32>,
    %c0_i32_28 = arith.constant 0 : i32
    %46 = arith.cmpi eq, %arg2, %c0_i32_28 : i32
    %47 = arith.extui %46 : i1 to i32
    %c0_i32_29 = arith.constant 0 : i32
    %48 = arith.cmpi ne, %47, %c0_i32_29 : i32
    scf.if %48 {
      %c0_32 = arith.constant 0 : index
      %c0_33 = arith.constant 0 : index
      %54 = vector.load %arg17[%c0_32, %c0_33] : memref<16x1xf32, #tpu.memory_space<vmem>>, vector<16x1xf32>
      %cst_34 = arith.constant 9.99999997E-7 : f32
      %55 = vector.broadcast %cst_34 : f32 to vector<16x1xf32>
      %56 = arith.addf %54, %55 : vector<16x1xf32>
      %57 = tpu.reciprocal %56 {approx = true} : vector<16x1xf32> -> vector<16x1xf32>
      %c0_35 = arith.constant 0 : index
      %c0_36 = arith.constant 0 : index
      %58 = vector.load %arg18[%c0_35, %c0_36] : memref<16x32xf32, #tpu.memory_space<vmem>>, vector<16x32xf32>
      %59 = vector.broadcast %57 : vector<16x1xf32> to vector<16x32xf32>
      %60 = arith.mulf %58, %59 : vector<16x32xf32>
      %c0_37 = arith.constant 0 : index
      %c0_38 = arith.constant 0 : index
      %61 = vector.load %arg15[%c0_37, %c0_38] : memref<16x32xf32, #tpu.memory_space<vmem>>, vector<16x32xf32>
      tpu.vector_store %arg15[%c0_37, %c0_38], %60 {strides = array<i32>} : memref<16x32xf32, #tpu.memory_space<vmem>>, vector<16x32xf32>,
    } else {
    }
    %c3_i32 = arith.constant 3 : i32
    %49 = arith.cmpi eq, %arg1, %c3_i32 : i32
    %c0_i32_30 = arith.constant 0 : i32
    %50 = arith.cmpi eq, %arg2, %c0_i32_30 : i32
    %51 = arith.andi %49, %50 : i1
    %52 = arith.extui %51 : i1 to i32
    %c0_i32_31 = arith.constant 0 : i32
    %53 = arith.cmpi ne, %52, %c0_i32_31 : i32
    scf.if %53 {
      %c0_32 = arith.constant 0 : index
      %c0_33 = arith.constant 0 : index
      %54 = vector.load %arg12[%c0_32, %c0_33] : memref<16x32xf32, #tpu.memory_space<vmem>>, vector<16x32xf32>
      %c0_34 = arith.constant 0 : index
      %c0_35 = arith.constant 0 : index
      %55 = vector.load %arg8[%c0_34, %c0_35] : memref<32x128xf32, #tpu.memory_space<vmem>>, vector<32x128xf32>
      %cst_36 = arith.constant dense<0.000000e+00> : vector<16x128xf32>
      %56 = tpu.matmul %54, %55, %cst_36 {dimension_numbers = #tpu.dot_dimension_numbers<[1], [0], [0], [1], [0, 0, 1, 1], [], []>} : vector<16x32xf32>, vector<32x128xf32>, vector<16x128xf32> -> vector<16x128xf32>
      %c0_37 = arith.constant 0 : index
      %c0_38 = arith.constant 0 : index
      %57 = vector.load %arg15[%c0_37, %c0_38] : memref<16x32xf32, #tpu.memory_space<vmem>>, vector<16x32xf32>
      %c0_39 = arith.constant 0 : index
      %c0_40 = arith.constant 0 : index
      %58 = vector.load %arg9[%c0_39, %c0_40] : memref<32x128xf32, #tpu.memory_space<vmem>>, vector<32x128xf32>
      %cst_41 = arith.constant dense<0.000000e+00> : vector<16x128xf32>
      %59 = tpu.matmul %57, %58, %cst_41 {dimension_numbers = #tpu.dot_dimension_numbers<[1], [0], [0], [1], [0, 0, 1, 1], [], []>} : vector<16x32xf32>, vector<32x128xf32>, vector<16x128xf32> -> vector<16x128xf32>
      %60 = arith.addf %56, %59 : vector<16x128xf32>
      %c0_42 = arith.constant 0 : index
      %c0_43 = arith.constant 0 : index
      %61 = vector.load %arg10[%c0_42, %c0_43] : memref<1x128xf32, #tpu.memory_space<vmem>>, vector<1x128xf32>
      %62 = vector.broadcast %61 : vector<1x128xf32> to vector<16x128xf32>
      %63 = arith.addf %60, %62 : vector<16x128xf32>
      %c0_44 = arith.constant 0 : index
      %c0_45 = arith.constant 0 : index
      %64 = vector.load %arg11[%c0_44, %c0_45] : memref<16x128xf32, #tpu.memory_space<vmem>>, vector<16x128xf32>
      tpu.vector_store %arg11[%c0_44, %c0_45], %63 {strides = array<i32>} : memref<16x128xf32, #tpu.memory_space<vmem>>, vector<16x128xf32>,
    } else {
    }
    return
  }
  func.func @transform_0(%arg0: i32, %arg1: i32, %arg2: i32) -> (i32, i32) {
    %c0_i32 = arith.constant 0 : i32
    %c0_i32_0 = arith.constant 0 : i32
    return %arg2, %c0_i32 : i32, i32
  }
  func.func @transform_1(%arg0: i32, %arg1: i32, %arg2: i32) -> (i32, i32) {
    %c0_i32 = arith.constant 0 : i32
    %c0_i32_0 = arith.constant 0 : i32
    return %c0_i32, %arg2 : i32, i32
  }
  func.func @transform_2(%arg0: i32, %arg1: i32, %arg2: i32) -> (i32, i32, i32) {
    %c0_i32 = arith.constant 0 : i32
    %c0_i32_0 = arith.constant 0 : i32
    %c0_i32_1 = arith.constant 0 : i32
    %c0_i32_2 = arith.constant 0 : i32
    return %c0_i32, %c0_i32_0, %c0_i32_1 : i32, i32, i32
  }
  func.func @transform_3(%arg0: i32, %arg1: i32, %arg2: i32) -> (i32, i32, i32) {
    %c0_i32 = arith.constant 0 : i32
    %c0_i32_0 = arith.constant 0 : i32
    %c0_i32_1 = arith.constant 0 : i32
    %c0_i32_2 = arith.constant 0 : i32
    return %c0_i32, %c0_i32_0, %c0_i32_1 : i32, i32, i32
  }
  func.func @transform_4(%arg0: i32, %arg1: i32, %arg2: i32) -> (i32, i32, i32) {
    %c0_i32 = arith.constant 0 : i32
    %c0_i32_0 = arith.constant 0 : i32
    %c0_i32_1 = arith.constant 0 : i32
    %c0_i32_2 = arith.constant 0 : i32
    return %c0_i32, %c0_i32_0, %c0_i32_1 : i32, i32, i32
  }
  func.func @transform_5(%arg0: i32, %arg1: i32, %arg2: i32) -> (i32, i32) {
    %c0_i32 = arith.constant 0 : i32
    %c0_i32_0 = arith.constant 0 : i32
    %c0_i32_1 = arith.constant 0 : i32
    return %c0_i32, %c0_i32_0 : i32, i32
  }
  func.func @transform_6(%arg0: i32, %arg1: i32, %arg2: i32) -> (i32, i32) {
    %c0_i32 = arith.constant 0 : i32
    %c0_i32_0 = arith.constant 0 : i32
    %c0_i32_1 = arith.constant 0 : i32
    return %c0_i32, %c0_i32_0 : i32, i32
  }
  func.func @transform_7(%arg0: i32, %arg1: i32, %arg2: i32) -> (i32, i32) {
    %c0_i32 = arith.constant 0 : i32
    %c0_i32_0 = arith.constant 0 : i32
    %c0_i32_1 = arith.constant 0 : i32
    return %c0_i32, %c0_i32_0 : i32, i32
  }
  func.func @transform_8(%arg0: i32, %arg1: i32, %arg2: i32) -> (i32, i32) {
    %c0_i32 = arith.constant 0 : i32
    %c0_i32_0 = arith.constant 0 : i32
    return %arg0, %c0_i32 : i32, i32
  }
}

</mosaic_0001>

<llo_original>
// kernel: tpu_custom_call.1
$region0: #{tpu_custom_call.1}
  #allocation0 [shape = 'u32[]', space=smem, size = 0x4, offset = 0x4, fixed_abs, tag = 'smem constant byte address 0x4 - core index']
  #allocation1 [shape = 'u32[72,128]{1,0:T(1,128)}', space=vmem, size = 0x9000, scoped, tag = 'internal scratch']
  #allocation2 [shape = 'f32[16,32]{1,0:T(8,128)}', space=vmem, size = 0x2000, scoped, tag = 'scratch operand']
  #allocation3 [shape = 'f32[16,32]{1,0:T(8,128)}', space=vmem, size = 0x2000, scoped, tag = 'scratch operand']
  #allocation4 [shape = 'bf16[16,32]{1,0:T(8,128)(2,1)}', space=vmem, size = 0x1000, scoped, tag = 'scratch operand']
  #allocation5 [shape = 'f32[16,32]{1,0:T(8,128)}', space=vmem, size = 0x2000, scoped, tag = 'scratch operand']
  #allocation6 [shape = 'f32[16,1]{1,0:T(8,128)}', space=vmem, size = 0x2000, scoped, tag = 'scratch operand']
  #allocation7 [shape = 'f32[16,1]{1,0:T(8,128)}', space=vmem, size = 0x2000, scoped, tag = 'scratch operand']
  #allocation8 [shape = 'f32[16,32]{1,0:T(8,128)}', space=vmem, size = 0x2000, scoped, tag = 'scratch operand']
  %s0 = inlined_call_operand.vmem [shape: bf16[128,32], index: 0, kind: input, shape index: {}]
  %s1 = inlined_call_operand.vmem [shape: s32[1,128], index: 1, kind: input, shape index: {}]
  %s2 = inlined_call_operand.hbm [shape: f32[4,32,32], index: 2, kind: input, shape index: {}]
  %s3 = inlined_call_operand.hbm [shape: f32[4,32,32], index: 3, kind: input, shape index: {}]
  %s4 = inlined_call_operand.vmem [shape: f32[4,1,32], index: 4, kind: input, shape index: {}]
  %s5 = inlined_call_operand.vmem [shape: f32[32,128], index: 5, kind: input, shape index: {}]
  %s6 = inlined_call_operand.vmem [shape: f32[32,128], index: 6, kind: input, shape index: {}]
  %s7 = inlined_call_operand.vmem [shape: f32[1,128], index: 7, kind: input, shape index: {}]
  %s8 = inlined_call_operand.hbm [shape: f32[16,128], index: 8, kind: output, shape index: {}]
  %s9 = sld [smem:[#allocation0]]
  $region89: #{tpu_custom_call.1} parent=0
    _
  %s11 = ssub.s32 1, %s9
  %s12 = scalar_select 0, %s11, %s9
  $region1: #{tpu_custom_call.1} parent=0
    #allocation9 [shape = 'u8[65536]{0}', space=vmem, size = 0x10000, scoped, tag = 'input window, operand 2, single buffered']
    #allocation10 [shape = 's32[2]{0}', space=sflag, size = 0x8, scoped, tag = 'scoped memory for tpu_custom_call.1']
    #allocation11 [shape = 's32[2]{0}', space=sflag, size = 0x8, scoped, tag = 'scoped memory for tpu_custom_call.1']
    #allocation12 [shape = 'u8[65536]{0}', space=vmem, size = 0x10000, scoped, tag = 'input window, operand 3, single buffered']
    #allocation13 [shape = 's32[1]{0}', space=sflag, size = 0x4, scoped, tag = 'scoped memory for tpu_custom_call.1']
    #allocation14 [shape = 'u8[8192]{0}', space=vmem, size = 0x2000, scoped, tag = 'output window, operand 0, single buffered']
    %13 = vsyncpa [#allocation10], 0
    %14 = vsyncpa [#allocation13], 0
    %15 = vsyncpa [#allocation11], 0
    loop: start=0, step=1, limit=6
    $region2: #{tpu_custom_call.1} parent=1 // loop_pre_header
      _
    $region3: #{tpu_custom_call.1} parent=1 // loop_header
      %s17 = sphi 0, %s21
      %p18 = scmp.ge.s32.totalorder %s17, 6
      %s24 = sphi 0, %s43
      %s25 = sphi 0, %s39
      %s26 = sphi 0, %s35
      %s27 = sphi 0, %s24
      %s28 = sphi 0, %s25
      %s29 = sphi 0, %s26
      %s30 = sphi 0, %s27
      %s31 = sphi 0, %s28
      %s32 = sphi 0, %s29
      %s46 = sphi 0, %s48
      %s49 = sphi 0, %s46
      %s50 = sphi 0, %s49
      %s66 = sphi 0, %s50
      %s72 = sphi 0, %s74
      %s75 = sphi 0, %s72
      %s76 = sphi 0, %s75
      %s92 = sphi 0, %s76
      %s96 = sphi 0, %s96
      %s98 = sphi 0, %s96
      %s99 = sphi 0, %s98
      %s113 = sphi 0, %s99
      %s117 = sphi 0, %s117
      %s119 = sphi 0, %s117
      %s120 = sphi 0, %s119
      %s134 = sphi 0, %s120
      %s138 = sphi 0, %s138
      %s140 = sphi 0, %s138
      %s141 = sphi 0, %s140
      %s155 = sphi 0, %s141
      %s159 = sphi 0, %s159
      %s161 = sphi 0, %s159
      %s162 = sphi 0, %s161
      %s176 = sphi 0, %s162
      %s180 = sphi 0, %s180
      %s182 = sphi 0, %s180
      %s183 = sphi 0, %s182
      %s197 = sphi 0, %s183
      %s201 = sphi 0, %s201
      %s203 = sphi 0, %s201
      %s204 = sphi 0, %s203
      %s218 = sphi 0, %s204
      %s224 = sphi 0, %s226
      %s227 = sphi 0, %s224
      %s228 = sphi 0, %s227
      %s244 = sphi 0, %s228
    $region4: #{tpu_custom_call.1} parent=1 // loop_header_branch
      %20 = sbr.rel (%p18) target = $region8
    $region5: #{tpu_custom_call.1} parent=1 // loop_body
      %s22 = ssub.s32 %s17, 1
      %s23 = ssub.s32 %s17, 2
      %s33 = sadd.s32 1, %s26
      %p34 = scmp.ge.s32.totalorder %s33, 1
      %s35 = scalar_select %p34, 0, %s33
      %s36 = sadd.s32 1, %s25
      %s37 = scalar_select %p34, %s36, %s25
      %p38 = scmp.ge.s32.totalorder %s37, 4
      %s39 = scalar_select %p38, 0, %s37
      %s40 = sadd.s32 1, %s24
      %s41 = scalar_select %p38, %s40, %s24
      %p42 = scmp.ge.s32.totalorder %s41, 1
      %s43 = scalar_select %p42, 0, %s41
      %s44 = ssub.s32 %s26, %s35
      %p45 = scmp.eq.s32.totalorder %s44, 0
      %s47 = sadd.s32 %s46, 1
      %s48 = scalar_select %p45, %s46, %s47
      %p51 = pneg %p45
      %p52 = scmp.eq.s32.totalorder %s17, 3
      %p53 = por %p51, %p52
      %p54 = scmp.ne.s32.totalorder %s46, %s49
      %p55 = scmp.eq.s32.totalorder %s17, 0
      %p56 = por %p54, %p55
      %p57 = scmp.ne.s32.totalorder %s46, %s49
      %p58 = scmp.eq.s32.totalorder %s22, 3
      %p59 = por %p57, %p58
      %p60 = scmp.ne.s32.totalorder %s49, %s50
      %p61 = scmp.eq.s32.totalorder %s22, 0
      %p62 = por %p60, %p61
      %p63 = scmp.ne.s32.totalorder %s49, %s50
      %p64 = scmp.eq.s32.totalorder %s23, 3
      %p65 = por %p63, %p64
      %p67 = scmp.ne.s32.totalorder %s50, %s66
      %p68 = scmp.eq.s32.totalorder %s23, 0
      %p69 = por %p67, %p68
      %s70 = ssub.s32 %s26, %s35
      %p71 = scmp.eq.s32.totalorder %s70, 0
      %s73 = sadd.s32 %s72, 1
      %s74 = scalar_select %p71, %s72, %s73
      %p77 = pneg %p71
      %p78 = scmp.eq.s32.totalorder %s17, 3
      %p79 = por %p77, %p78
      %p80 = scmp.ne.s32.totalorder %s72, %s75
      %p81 = scmp.eq.s32.totalorder %s17, 0
      %p82 = por %p80, %p81
      %p83 = scmp.ne.s32.totalorder %s72, %s75
      %p84 = scmp.eq.s32.totalorder %s22, 3
      %p85 = por %p83, %p84
      %p86 = scmp.ne.s32.totalorder %s75, %s76
      %p87 = scmp.eq.s32.totalorder %s22, 0
      %p88 = por %p86, %p87
      %p89 = scmp.ne.s32.totalorder %s75, %s76
      %p90 = scmp.eq.s32.totalorder %s23, 3
      %p91 = por %p89, %p90
      %p93 = scmp.ne.s32.totalorder %s76, %s92
      %p94 = scmp.eq.s32.totalorder %s23, 0
      %p95 = por %p93, %p94
      %s97 = sadd.s32 %s96, 1
      %p100 = scmp.eq.s32.totalorder %s17, 3
      %p101 = scmp.ne.s32.totalorder %s96, %s98
      %p102 = scmp.eq.s32.totalorder %s17, 0
      %p103 = por %p101, %p102
      %p104 = scmp.ne.s32.totalorder %s96, %s98
      %p105 = scmp.eq.s32.totalorder %s22, 3
      %p106 = por %p104, %p105
      %p107 = scmp.ne.s32.totalorder %s98, %s99
      %p108 = scmp.eq.s32.totalorder %s22, 0
      %p109 = por %p107, %p108
      %p110 = scmp.ne.s32.totalorder %s98, %s99
      %p111 = scmp.eq.s32.totalorder %s23, 3
      %p112 = por %p110, %p111
      %p114 = scmp.ne.s32.totalorder %s99, %s113
      %p115 = scmp.eq.s32.totalorder %s23, 0
      %p116 = por %p114, %p115
      %s118 = sadd.s32 %s117, 1
      %p121 = scmp.eq.s32.totalorder %s17, 3
      %p122 = scmp.ne.s32.totalorder %s117, %s119
      %p123 = scmp.eq.s32.totalorder %s17, 0
      %p124 = por %p122, %p123
      %p125 = scmp.ne.s32.totalorder %s117, %s119
      %p126 = scmp.eq.s32.totalorder %s22, 3
      %p127 = por %p125, %p126
      %p128 = scmp.ne.s32.totalorder %s119, %s120
      %p129 = scmp.eq.s32.totalorder %s22, 0
      %p130 = por %p128, %p129
      %p131 = scmp.ne.s32.totalorder %s119, %s120
      %p132 = scmp.eq.s32.totalorder %s23, 3
      %p133 = por %p131, %p132
      %p135 = scmp.ne.s32.totalorder %s120, %s134
      %p136 = scmp.eq.s32.totalorder %s23, 0
      %p137 = por %p135, %p136
      %s139 = sadd.s32 %s138, 1
      %p142 = scmp.eq.s32.totalorder %s17, 3
      %p143 = scmp.ne.s32.totalorder %s138, %s140
      %p144 = scmp.eq.s32.totalorder %s17, 0
      %p145 = por %p143, %p144
      %p146 = scmp.ne.s32.totalorder %s138, %s140
      %p147 = scmp.eq.s32.totalorder %s22, 3
      %p148 = por %p146, %p147
      %p149 = scmp.ne.s32.totalorder %s140, %s141
      %p150 = scmp.eq.s32.totalorder %s22, 0
      %p151 = por %p149, %p150
      %p152 = scmp.ne.s32.totalorder %s140, %s141
      %p153 = scmp.eq.s32.totalorder %s23, 3
      %p154 = por %p152, %p153
      %p156 = scmp.ne.s32.totalorder %s141, %s155
      %p157 = scmp.eq.s32.totalorder %s23, 0
      %p158 = por %p156, %p157
      %s160 = sadd.s32 %s159, 1
      %p163 = scmp.eq.s32.totalorder %s17, 3
      %p164 = scmp.ne.s32.totalorder %s159, %s161
      %p165 = scmp.eq.s32.totalorder %s17, 0
      %p166 = por %p164, %p165
      %p167 = scmp.ne.s32.totalorder %s159, %s161
      %p168 = scmp.eq.s32.totalorder %s22, 3
      %p169 = por %p167, %p168
      %p170 = scmp.ne.s32.totalorder %s161, %s162
      %p171 = scmp.eq.s32.totalorder %s22, 0
      %p172 = por %p170, %p171
      %p173 = scmp.ne.s32.totalorder %s161, %s162
      %p174 = scmp.eq.s32.totalorder %s23, 3
      %p175 = por %p173, %p174
      %p177 = scmp.ne.s32.totalorder %s162, %s176
      %p178 = scmp.eq.s32.totalorder %s23, 0
      %p179 = por %p177, %p178
      %s181 = sadd.s32 %s180, 1
      %p184 = scmp.eq.s32.totalorder %s17, 3
      %p185 = scmp.ne.s32.totalorder %s180, %s182
      %p186 = scmp.eq.s32.totalorder %s17, 0
      %p187 = por %p185, %p186
      %p188 = scmp.ne.s32.totalorder %s180, %s182
      %p189 = scmp.eq.s32.totalorder %s22, 3
      %p190 = por %p188, %p189
      %p191 = scmp.ne.s32.totalorder %s182, %s183
      %p192 = scmp.eq.s32.totalorder %s22, 0
      %p193 = por %p191, %p192
      %p194 = scmp.ne.s32.totalorder %s182, %s183
      %p195 = scmp.eq.s32.totalorder %s23, 3
      %p196 = por %p194, %p195
      %p198 = scmp.ne.s32.totalorder %s183, %s197
      %p199 = scmp.eq.s32.totalorder %s23, 0
      %p200 = por %p198, %p199
      %s202 = sadd.s32 %s201, 1
      %p205 = scmp.eq.s32.totalorder %s17, 3
      %p206 = scmp.ne.s32.totalorder %s201, %s203
      %p207 = scmp.eq.s32.totalorder %s17, 0
      %p208 = por %p206, %p207
      %p209 = scmp.ne.s32.totalorder %s201, %s203
      %p210 = scmp.eq.s32.totalorder %s22, 3
      %p211 = por %p209, %p210
      %p212 = scmp.ne.s32.totalorder %s203, %s204
      %p213 = scmp.eq.s32.totalorder %s22, 0
      %p214 = por %p212, %p213
      %p215 = scmp.ne.s32.totalorder %s203, %s204
      %p216 = scmp.eq.s32.totalorder %s23, 3
      %p217 = por %p215, %p216
      %p219 = scmp.ne.s32.totalorder %s204, %s218
      %p220 = scmp.eq.s32.totalorder %s23, 0
      %p221 = por %p219, %p220
      %s222 = ssub.s32 %s24, %s43
      %p223 = scmp.eq.s32.totalorder %s222, 0
      %s225 = sadd.s32 %s224, 1
      %s226 = scalar_select %p223, %s224, %s225
      %p229 = pneg %p223
      %p230 = scmp.eq.s32.totalorder %s17, 3
      %p231 = por %p229, %p230
      %p232 = scmp.ne.s32.totalorder %s224, %s227
      %p233 = scmp.eq.s32.totalorder %s17, 0
      %p234 = por %p232, %p233
      %p235 = scmp.ne.s32.totalorder %s224, %s227
      %p236 = scmp.eq.s32.totalorder %s22, 3
      %p237 = por %p235, %p236
      %p238 = scmp.ne.s32.totalorder %s227, %s228
      %p239 = scmp.eq.s32.totalorder %s22, 0
      %p240 = por %p238, %p239
      %p241 = scmp.ne.s32.totalorder %s227, %s228
      %p242 = scmp.eq.s32.totalorder %s23, 3
      %p243 = por %p241, %p242
      %p245 = scmp.ne.s32.totalorder %s228, %s244
      %p246 = scmp.eq.s32.totalorder %s23, 0
      %p247 = por %p245, %p246
      %p248 = scmp.le.s32.totalorder 1, %s17
      %p249 = scmp.lt.s32.totalorder %s17, 5
      %p250 = pnand %p248, %p249
      %p251 = pneg %p250
      // Predicated region
      $region9: #{tpu_custom_call.1} parent=5 // pred_check
        _
      $region10: #{tpu_custom_call.1} parent=5 // pred_check_branch
        %253 = sbr.rel (%p250) target = $region12
      $region11: #{tpu_custom_call.1} parent=5 // pred_region
        %s254 = ssub.s32 %s17, 1
        // Predicated region
        $region13: #{tpu_custom_call.1} parent=11 // pred_check
          %p255 = pneg %p62
        $region14: #{tpu_custom_call.1} parent=11 // pred_check_branch
          %257 = sbr.rel (%p255) target = $region16
        $region15: #{tpu_custom_call.1} parent=11 // pred_region
          %s258 = smul.u32 16, %s29
          %p259 = scmp.lt.s32.totalorder %s258, 15
          %s260 = scalar_select %p259, %s258, 15
          %s261 = smul.addr %s260, 4
          %s262 = scalar_lea.vmem %s0, %s261
          %s263 = smul.u32 16, %s29
        $region16: #{tpu_custom_call.1} parent=11 // pred_fallthru
          _
        // Predicated region
        $region17: #{tpu_custom_call.1} parent=11 // pred_check
          %p264 = pneg %p88
        $region18: #{tpu_custom_call.1} parent=11 // pred_check_branch
          %266 = sbr.rel (%p264) target = $region20
        $region19: #{tpu_custom_call.1} parent=11 // pred_region
          %p267 = scmp.lt.s32.totalorder %s29, 0
          %s268 = scalar_select %p267, %s29, 0
          %s269 = scalar_lea.vmem %s1, %s268
        $region20: #{tpu_custom_call.1} parent=11 // pred_fallthru
          _
        // Predicated region
        $region21: #{tpu_custom_call.1} parent=11 // pred_check
          %p270 = pneg %p109
        $region22: #{tpu_custom_call.1} parent=11 // pred_check_branch
          %272 = sbr.rel (%p270) target = $region24
        $region23: #{tpu_custom_call.1} parent=11 // pred_region
          %274 = vsyncadd [#allocation10], 0
          %s275 = sshll.u32 %s2, 4
          %s276 = int_to_ptr.hbm [resolvable:$true] %s275
          %s277 = sshll.u32 [#allocation9], 4
          %s278 = int_to_ptr.vmem [resolvable:$true] %s277
          %283 = dma.hbm_to_vmem [thread:$0]  %s276, 2048, %s278, [#allocation10], 128, 128, 8
        $region24: #{tpu_custom_call.1} parent=11 // pred_fallthru
          _
        // Predicated region
        $region25: #{tpu_custom_call.1} parent=11 // pred_check
          %p284 = pneg %p130
        $region26: #{tpu_custom_call.1} parent=11 // pred_check_branch
          %286 = sbr.rel (%p284) target = $region28
        $region27: #{tpu_custom_call.1} parent=11 // pred_region
          %288 = vsyncadd [#allocation13], 0
          %s289 = sshll.u32 %s3, 4
          %s290 = int_to_ptr.hbm [resolvable:$true] %s289
          %s291 = sshll.u32 [#allocation12], 4
          %s292 = int_to_ptr.vmem [resolvable:$true] %s291
          %297 = dma.hbm_to_vmem [thread:$0]  %s290, 2048, %s292, [#allocation13], 128, 128, 8
        $region28: #{tpu_custom_call.1} parent=11 // pred_fallthru
          _
        // Predicated region
        $region29: #{tpu_custom_call.1} parent=11 // pred_check
          %p298 = pneg %p151
        $region30: #{tpu_custom_call.1} parent=11 // pred_check_branch
          %300 = sbr.rel (%p298) target = $region32
        $region31: #{tpu_custom_call.1} parent=11 // pred_region
          _
        $region32: #{tpu_custom_call.1} parent=11 // pred_fallthru
          _
        // Predicated region
        $region33: #{tpu_custom_call.1} parent=11 // pred_check
          %p301 = pneg %p172
        $region34: #{tpu_custom_call.1} parent=11 // pred_check_branch
          %303 = sbr.rel (%p301) target = $region36
        $region35: #{tpu_custom_call.1} parent=11 // pred_region
          _
        $region36: #{tpu_custom_call.1} parent=11 // pred_fallthru
          _
        // Predicated region
        $region37: #{tpu_custom_call.1} parent=11 // pred_check
          %p304 = pneg %p193
        $region38: #{tpu_custom_call.1} parent=11 // pred_check_branch
          %306 = sbr.rel (%p304) target = $region40
        $region39: #{tpu_custom_call.1} parent=11 // pred_region
          _
        $region40: #{tpu_custom_call.1} parent=11 // pred_fallthru
          _
        // Predicated region
        $region41: #{tpu_custom_call.1} parent=11 // pred_check
          %p307 = pneg %p214
        $region42: #{tpu_custom_call.1} parent=11 // pred_check_branch
          %309 = sbr.rel (%p307) target = $region44
        $region43: #{tpu_custom_call.1} parent=11 // pred_region
          _
        $region44: #{tpu_custom_call.1} parent=11 // pred_fallthru
          _
      $region12: #{tpu_custom_call.1} parent=5 // pred_fallthru
        _
      %p310 = scmp.lt.s32.totalorder %s17, 4
      // Predicated region
      $region45: #{tpu_custom_call.1} parent=5 // pred_check
        %p311 = pneg %p310
      $region46: #{tpu_custom_call.1} parent=5 // pred_check_branch
        %313 = sbr.rel (%p311) target = $region48
      $region47: #{tpu_custom_call.1} parent=5 // pred_region
        _
      $region48: #{tpu_custom_call.1} parent=5 // pred_fallthru
        _
      %p314 = scmp.le.s32.totalorder 1, %s17
      %p315 = scmp.lt.s32.totalorder %s17, 5
      %p316 = pnand %p314, %p315
      %p317 = pneg %p316
      // Predicated region
      $region49: #{tpu_custom_call.1} parent=5 // pred_check
        _
      $region50: #{tpu_custom_call.1} parent=5 // pred_check_branch
        %319 = sbr.rel (%p316) target = $region52
      $region51: #{tpu_custom_call.1} parent=5 // pred_region
        %s320 = ssub.s32 %s17, 1
        // Predicated region
        $region53: #{tpu_custom_call.1} parent=51 // pred_check
          %p321 = pneg %p109
        $region54: #{tpu_custom_call.1} parent=51 // pred_check_branch
          %323 = sbr.rel (%p321) target = $region56
        $region55: #{tpu_custom_call.1} parent=51 // pred_region
          %325 = dma.done [#allocation10], 2048
        $region56: #{tpu_custom_call.1} parent=51 // pred_fallthru
          _
        // Predicated region
        $region57: #{tpu_custom_call.1} parent=51 // pred_check
          %p326 = pneg %p130
        $region58: #{tpu_custom_call.1} parent=51 // pred_check_branch
          %328 = sbr.rel (%p326) target = $region60
        $region59: #{tpu_custom_call.1} parent=51 // pred_region
          %330 = dma.done [#allocation13], 2048
        $region60: #{tpu_custom_call.1} parent=51 // pred_fallthru
          _
        %s331 = smul.u32 16, %s29
        %p332 = scmp.lt.s32.totalorder %s331, 15
        %s333 = scalar_select %p332, %s331, 15
        %s334 = smul.addr %s333, 4
        %s335 = scalar_lea.vmem %s0, %s334
        %p336 = pneg %p62
        %p337 = pneg %p59
        %p338 = scmp.lt.s32.totalorder %s29, 0
        %s339 = scalar_select %p338, %s29, 0
        %s340 = scalar_lea.vmem %s1, %s339
        %p341 = pneg %p88
        %p342 = pneg %p85
        %p343 = pneg %p109
        %p344 = pneg %p106
        %p345 = pneg %p130
        %p346 = pneg %p127
        %p347 = pneg %p151
        %p348 = pneg %p148
        %p349 = pneg %p172
        %p350 = pneg %p169
        %p351 = pneg %p193
        %p352 = pneg %p190
        %p353 = pneg %p214
        %p354 = pneg %p211
        %p355 = pneg %p240
        %p356 = pneg %p237
        %s357 = smul.u32 16, %s29
        %p358 = scmp.lt.s32.totalorder %s357, 15
        %s359 = scalar_select %p358, %s357, 15
        %s360 = smul.addr %s359, 4
        %s361 = scalar_lea.vmem %s0, %s360
        %s362 = smul.u32 16, %s29
        %p363 = scmp.lt.s32.totalorder %s29, 0
        %s364 = scalar_select %p363, %s29, 0
        %s365 = scalar_lea.vmem %s1, %s364
        %s366 = smul.u32 2, %s27
        %p367 = scmp.eq.s32.totalorder %s28, 0
        %p368 = scmp.eq.s32.totalorder %s29, 0
        %p369 = pnand %p367, %p368
        %p370 = pneg %p369
        // Predicated region
        $region61: #{tpu_custom_call.1} parent=51 // pred_check
          _
        $region62: #{tpu_custom_call.1} parent=51 // pred_check_branch
          %372 = sbr.rel (%p369) target = $region64
        $region63: #{tpu_custom_call.1} parent=51 // pred_region
          %vm373 = vcmask 261120
          %374 = vst.msk [vmem:[#allocation2] sm:$0xff] %vm373, 0.0
          %375 = vst.msk [vmem:[#allocation2 + $0x8] sm:$0xff] %vm373, 0.0
          %376 = vst.msk [vmem:[#allocation3] sm:$0xff] %vm373, 0.0
          %377 = vst.msk [vmem:[#allocation3 + $0x8] sm:$0xff] %vm373, 0.0
          %378 = vst.msk [vmem:[#allocation5] sm:$0xff] %vm373, 0.0
          %379 = vst.msk [vmem:[#allocation5 + $0x8] sm:$0xff] %vm373, 0.0
        $region64: #{tpu_custom_call.1} parent=51 // pred_fallthru
          _
        // Predicated region
        $region65: #{tpu_custom_call.1} parent=51 // pred_check
          %p380 = pneg %p368
        $region66: #{tpu_custom_call.1} parent=51 // pred_check_branch
          %382 = sbr.rel (%p380) target = $region68
        $region67: #{tpu_custom_call.1} parent=51 // pred_region
          %v383 = vld [vmem:[#allocation2] sm:$0xff]
          %v384 = vld [vmem:[#allocation2 + $0x8] sm:$0xff]
          %v385 = vld [vmem:[#allocation3] sm:$0xff]
          %v386 = vld [vmem:[#allocation3 + $0x8] sm:$0xff]
          %v387 = vld [vmem:[#allocation5] sm:$0xff]
          %v388 = vld [vmem:[#allocation5 + $0x8] sm:$0xff]
          %v389 = vld [vmem:[#allocation9] sm:$0xff]
          %v390 = vld [vmem:[#allocation9 + $0x8] sm:$0xff]
          %v391 = vld [vmem:[#allocation9 + $0x10] sm:$0xff]
          %v392 = vld [vmem:[#allocation9 + $0x18] sm:$0xff]
          %v393 = vld [vmem:[#allocation12] sm:$0xff]
          %v394 = vld [vmem:[#allocation12 + $0x8] sm:$0xff]
          %v395 = vld [vmem:[#allocation12 + $0x10] sm:$0xff]
          %v396 = vld [vmem:[#allocation12 + $0x18] sm:$0xff]
          %vm397 = vcmask 261120
          %v399 = vsel %vm397, %v387, 0
          %v402 = vsel %vm397, %v388, 0
          %404 = vmatpush.msra.mxu0 0.0
          %405 = vmatpush.msra.mxu0 0.0
          %406 = vmatpush.msra.mxu0 0.0
          %407 = vmatpush.msra.mxu0 0.0
          %408 = vmatpush.msra.mxu0 0.0
          %409 = vmatpush.msra.mxu0 0.0
          %410 = vmatpush.msra.mxu0 0.0
          %411 = vmatpush.msra.mxu0 0.0
          %412 = vmatpush.msra.mxu0 0.0
          %413 = vmatpush.msra.mxu0 0.0
          %414 = vmatpush.msra.mxu0 0.0
          %415 = vmatpush.msra.mxu0 0.0
          %416 = vmatpush.msra.mxu0 %v396
          %417 = vmatpush.msra.mxu0 %v395
          %418 = vmatpush.msra.mxu0 %v394
          %419 = vmatpush.msra.mxu0 %v393
          %420 = vmatmul.f32.gmra.mxu0 %v399
          %v421 = vpop.f32.mrf.mxu0
          %v422 = vadd.f32 0.0, %v421
          %423 = vmatmul.f32.gmra.mxu0 %v402
          %v424 = vpop.f32.mrf.mxu0
          %v425 = vadd.f32 0.0, %v424
          %426 = vdwg.mxu0
          %v428 = vsel %vm397, %v383, 0
          %v431 = vsel %vm397, %v384, 0
          %433 = vmatpush.msra.mxu0 0.0
          %434 = vmatpush.msra.mxu0 0.0
          %435 = vmatpush.msra.mxu0 0.0
          %436 = vmatpush.msra.mxu0 0.0
          %437 = vmatpush.msra.mxu0 0.0
          %438 = vmatpush.msra.mxu0 0.0
          %439 = vmatpush.msra.mxu0 0.0
          %440 = vmatpush.msra.mxu0 0.0
          %441 = vmatpush.msra.mxu0 0.0
          %442 = vmatpush.msra.mxu0 0.0
          %443 = vmatpush.msra.mxu0 0.0
          %444 = vmatpush.msra.mxu0 0.0
          %445 = vmatpush.msra.mxu0 %v392
          %446 = vmatpush.msra.mxu0 %v391
          %447 = vmatpush.msra.mxu0 %v390
          %448 = vmatpush.msra.mxu0 %v389
          %449 = vmatmul.f32.gmra.mxu0 %v428
          %v450 = vpop.f32.mrf.mxu0
          %v451 = vadd.f32 %v422, %v450
          %452 = vmatmul.f32.gmra.mxu0 %v431
          %v453 = vpop.f32.mrf.mxu0
          %v454 = vadd.f32 %v425, %v453
          %455 = vdwg.mxu0
          %v456 = vld [vmem:[%s4] sm:$0x1]
          %v458 = vperm.slane %v456, 0
          %v460 = vadd.f32 %v451, %v458
          %v461 = vadd.f32 %v454, %v458
          %v462 = vxor.u32 %v460, 2147483648
          %v463 = vxor.u32 %v461, 2147483648
          %v464 = vmul.f32 %v462, 1.442695
          %v465 = vpow.pop %v464
          %v466 = vmul.f32 %v463, 1.442695
          %v467 = vpow.pop %v466
          %v468 = vadd.f32 %v465, 1.0
          %v469 = vadd.f32 %v467, 1.0
          %v470 = vrcp.pop %v468
          %v471 = vmul.f32 %v468, %v470
          %v472 = vsub.f32 1.0, %v471
          %v473 = vmul.f32 %v470, %v472
          %v474 = vadd.f32 %v470, %v473
          %vm475 = vweird.f32 %v468
          %vm476 = vweird.f32 %v470
          %vm477 = vmor %vm475, %vm476
          %v478 = vsel %vm477, %v470, %v474
          %v479 = vand.u32 2147483647, %v468
          %vm480 = vcmp.eq.f32.partialorder %v479, 8.507059e+37
          %v481 = vand.u32 %v468, 2147483648
          %v482 = vor.u32 1.1754944e-38, %v481
          %v483 = vsel %vm480, %v482, %v478
          %v484 = vmul.f32 1.0, %v483
          %v485 = vrcp.pop %v469
          %v486 = vmul.f32 %v469, %v485
          %v487 = vsub.f32 1.0, %v486
          %v488 = vmul.f32 %v485, %v487
          %v489 = vadd.f32 %v485, %v488
          %vm490 = vweird.f32 %v469
          %vm491 = vweird.f32 %v485
          %vm492 = vmor %vm490, %vm491
          %v493 = vsel %vm492, %v485, %v489
          %v494 = vand.u32 2147483647, %v469
          %vm495 = vcmp.eq.f32.partialorder %v494, 8.507059e+37
          %v496 = vand.u32 %v469, 2147483648
          %v497 = vor.u32 1.1754944e-38, %v496
          %v498 = vsel %vm495, %v497, %v493
          %v499 = vmul.f32 1.0, %v498
          %s500 = scalar_lea.vmem [#allocation9], 32
          %v501 = vld [vmem:[%s500] sm:$0xff]
          %v502 = vld [vmem:[%s500 + $0x8] sm:$0xff]
          %v503 = vld [vmem:[%s500 + $0x10] sm:$0xff]
          %v504 = vld [vmem:[%s500 + $0x18] sm:$0xff]
          %s505 = scalar_lea.vmem [#allocation12], 32
          %v506 = vld [vmem:[%s505] sm:$0xff]
          %v507 = vld [vmem:[%s505 + $0x8] sm:$0xff]
          %v508 = vld [vmem:[%s505 + $0x10] sm:$0xff]
          %v509 = vld [vmem:[%s505 + $0x18] sm:$0xff]
          %510 = vmatpush.msra.mxu0 0.0
          %511 = vmatpush.msra.mxu0 0.0
          %512 = vmatpush.msra.mxu0 0.0
          %513 = vmatpush.msra.mxu0 0.0
          %514 = vmatpush.msra.mxu0 0.0
          %515 = vmatpush.msra.mxu0 0.0
          %516 = vmatpush.msra.mxu0 0.0
          %517 = vmatpush.msra.mxu0 0.0
          %518 = vmatpush.msra.mxu0 0.0
          %519 = vmatpush.msra.mxu0 0.0
          %520 = vmatpush.msra.mxu0 0.0
          %521 = vmatpush.msra.mxu0 0.0
          %522 = vmatpush.msra.mxu0 %v509
          %523 = vmatpush.msra.mxu0 %v508
          %524 = vmatpush.msra.mxu0 %v507
          %525 = vmatpush.msra.mxu0 %v506
          %526 = vmatmul.f32.gmra.mxu0 %v399
          %v527 = vpop.f32.mrf.mxu0
          %v528 = vadd.f32 0.0, %v527
          %529 = vmatmul.f32.gmra.mxu0 %v402
          %v530 = vpop.f32.mrf.mxu0
          %v531 = vadd.f32 0.0, %v530
          %532 = vdwg.mxu0
          %533 = vmatpush.msra.mxu0 0.0
          %534 = vmatpush.msra.mxu0 0.0
          %535 = vmatpush.msra.mxu0 0.0
          %536 = vmatpush.msra.mxu0 0.0
          %537 = vmatpush.msra.mxu0 0.0
          %538 = vmatpush.msra.mxu0 0.0
          %539 = vmatpush.msra.mxu0 0.0
          %540 = vmatpush.msra.mxu0 0.0
          %541 = vmatpush.msra.mxu0 0.0
          %542 = vmatpush.msra.mxu0 0.0
          %543 = vmatpush.msra.mxu0 0.0
          %544 = vmatpush.msra.mxu0 0.0
          %545 = vmatpush.msra.mxu0 %v504
          %546 = vmatpush.msra.mxu0 %v503
          %547 = vmatpush.msra.mxu0 %v502
          %548 = vmatpush.msra.mxu0 %v501
          %549 = vmatmul.f32.gmra.mxu0 %v428
          %v550 = vpop.f32.mrf.mxu0
          %v551 = vadd.f32 %v528, %v550
          %552 = vmatmul.f32.gmra.mxu0 %v431
          %v553 = vpop.f32.mrf.mxu0
          %v554 = vadd.f32 %v531, %v553
          %555 = vdwg.mxu0
          %s556 = scalar_lea.vmem %s4, 1
          %v557 = vld [vmem:[%s556] sm:$0x1]
          %v559 = vperm.slane %v557, 0
          %v561 = vadd.f32 %v551, %v559
          %v562 = vadd.f32 %v554, %v559
          %v563 = vxor.u32 %v561, 2147483648
          %v564 = vxor.u32 %v562, 2147483648
          %v565 = vmul.f32 %v563, 1.442695
          %v566 = vpow.pop %v565
          %v567 = vmul.f32 %v564, 1.442695
          %v568 = vpow.pop %v567
          %v569 = vadd.f32 %v566, 1.0
          %v570 = vadd.f32 %v568, 1.0
          %v571 = vrcp.pop %v569
          %v572 = vmul.f32 %v569, %v571
          %v573 = vsub.f32 1.0, %v572
          %v574 = vmul.f32 %v571, %v573
          %v575 = vadd.f32 %v571, %v574
          %vm576 = vweird.f32 %v569
          %vm577 = vweird.f32 %v571
          %vm578 = vmor %vm576, %vm577
          %v579 = vsel %vm578, %v571, %v575
          %v580 = vand.u32 2147483647, %v569
          %vm581 = vcmp.eq.f32.partialorder %v580, 8.507059e+37
          %v582 = vand.u32 %v569, 2147483648
          %v583 = vor.u32 1.1754944e-38, %v582
          %v584 = vsel %vm581, %v583, %v579
          %v585 = vmul.f32 1.0, %v584
          %v586 = vrcp.pop %v570
          %v587 = vmul.f32 %v570, %v586
          %v588 = vsub.f32 1.0, %v587
          %v589 = vmul.f32 %v586, %v588
          %v590 = vadd.f32 %v586, %v589
          %vm591 = vweird.f32 %v570
          %vm592 = vweird.f32 %v586
          %vm593 = vmor %vm591, %vm592
          %v594 = vsel %vm593, %v586, %v590
          %v595 = vand.u32 2147483647, %v570
          %vm596 = vcmp.eq.f32.partialorder %v595, 8.507059e+37
          %v597 = vand.u32 %v570, 2147483648
          %v598 = vor.u32 1.1754944e-38, %v597
          %v599 = vsel %vm596, %v598, %v594
          %v600 = vmul.f32 1.0, %v599
          %s601 = scalar_lea.vmem [#allocation9], 64
          %v602 = vld [vmem:[%s601] sm:$0xff]
          %v603 = vld [vmem:[%s601 + $0x8] sm:$0xff]
          %v604 = vld [vmem:[%s601 + $0x10] sm:$0xff]
          %v605 = vld [vmem:[%s601 + $0x18] sm:$0xff]
          %s606 = scalar_lea.vmem [#allocation12], 64
          %v607 = vld [vmem:[%s606] sm:$0xff]
          %v608 = vld [vmem:[%s606 + $0x8] sm:$0xff]
          %v609 = vld [vmem:[%s606 + $0x10] sm:$0xff]
          %v610 = vld [vmem:[%s606 + $0x18] sm:$0xff]
          %611 = vmatpush.msra.mxu0 0.0
          %612 = vmatpush.msra.mxu0 0.0
          %613 = vmatpush.msra.mxu0 0.0
          %614 = vmatpush.msra.mxu0 0.0
          %615 = vmatpush.msra.mxu0 0.0
          %616 = vmatpush.msra.mxu0 0.0
          %617 = vmatpush.msra.mxu0 0.0
          %618 = vmatpush.msra.mxu0 0.0
          %619 = vmatpush.msra.mxu0 0.0
          %620 = vmatpush.msra.mxu0 0.0
          %621 = vmatpush.msra.mxu0 0.0
          %622 = vmatpush.msra.mxu0 0.0
          %623 = vmatpush.msra.mxu0 %v610
          %624 = vmatpush.msra.mxu0 %v609
          %625 = vmatpush.msra.mxu0 %v608
          %626 = vmatpush.msra.mxu0 %v607
          %627 = vmatmul.f32.gmra.mxu0 %v399
          %v628 = vpop.f32.mrf.mxu0
          %v629 = vadd.f32 0.0, %v628
          %630 = vmatmul.f32.gmra.mxu0 %v402
          %v631 = vpop.f32.mrf.mxu0
          %v632 = vadd.f32 0.0, %v631
          %633 = vdwg.mxu0
          %634 = vmatpush.msra.mxu0 0.0
          %635 = vmatpush.msra.mxu0 0.0
          %636 = vmatpush.msra.mxu0 0.0
          %637 = vmatpush.msra.mxu0 0.0
          %638 = vmatpush.msra.mxu0 0.0
          %639 = vmatpush.msra.mxu0 0.0
          %640 = vmatpush.msra.mxu0 0.0
          %641 = vmatpush.msra.mxu0 0.0
          %642 = vmatpush.msra.mxu0 0.0
          %643 = vmatpush.msra.mxu0 0.0
          %644 = vmatpush.msra.mxu0 0.0
          %645 = vmatpush.msra.mxu0 0.0
          %646 = vmatpush.msra.mxu0 %v605
          %647 = vmatpush.msra.mxu0 %v604
          %648 = vmatpush.msra.mxu0 %v603
          %649 = vmatpush.msra.mxu0 %v602
          %650 = vmatmul.f32.gmra.mxu0 %v428
          %v651 = vpop.f32.mrf.mxu0
          %v652 = vadd.f32 %v629, %v651
          %653 = vmatmul.f32.gmra.mxu0 %v431
          %v654 = vpop.f32.mrf.mxu0
          %v655 = vadd.f32 %v632, %v654
          %656 = vdwg.mxu0
          %s657 = scalar_lea.vmem %s4, 2
          %v658 = vld [vmem:[%s657] sm:$0x1]
          %v660 = vperm.slane %v658, 0
          %v662 = vadd.f32 %v652, %v660
          %v663 = vadd.f32 %v655, %v660
          %v664 = vtanh.pop %v662
          %v665 = vtanh.pop %v663
          %s666 = scalar_lea.vmem [#allocation9], 96
          %v667 = vld [vmem:[%s666] sm:$0xff]
          %v668 = vld [vmem:[%s666 + $0x8] sm:$0xff]
          %v669 = vld [vmem:[%s666 + $0x10] sm:$0xff]
          %v670 = vld [vmem:[%s666 + $0x18] sm:$0xff]
          %s671 = scalar_lea.vmem [#allocation12], 96
          %v672 = vld [vmem:[%s671] sm:$0xff]
          %v673 = vld [vmem:[%s671 + $0x8] sm:$0xff]
          %v674 = vld [vmem:[%s671 + $0x10] sm:$0xff]
          %v675 = vld [vmem:[%s671 + $0x18] sm:$0xff]
          %676 = vmatpush.msra.mxu0 0.0
          %677 = vmatpush.msra.mxu0 0.0
          %678 = vmatpush.msra.mxu0 0.0
          %679 = vmatpush.msra.mxu0 0.0
          %680 = vmatpush.msra.mxu0 0.0
          %681 = vmatpush.msra.mxu0 0.0
          %682 = vmatpush.msra.mxu0 0.0
          %683 = vmatpush.msra.mxu0 0.0
          %684 = vmatpush.msra.mxu0 0.0
          %685 = vmatpush.msra.mxu0 0.0
          %686 = vmatpush.msra.mxu0 0.0
          %687 = vmatpush.msra.mxu0 0.0
          %688 = vmatpush.msra.mxu0 %v675
          %689 = vmatpush.msra.mxu0 %v674
          %690 = vmatpush.msra.mxu0 %v673
          %691 = vmatpush.msra.mxu0 %v672
          %692 = vmatmul.f32.gmra.mxu0 %v399
          %v693 = vpop.f32.mrf.mxu0
          %v694 = vadd.f32 0.0, %v693
          %695 = vmatmul.f32.gmra.mxu0 %v402
          %v696 = vpop.f32.mrf.mxu0
          %v697 = vadd.f32 0.0, %v696
          %698 = vdwg.mxu0
          %699 = vmatpush.msra.mxu0 0.0
          %700 = vmatpush.msra.mxu0 0.0
          %701 = vmatpush.msra.mxu0 0.0
          %702 = vmatpush.msra.mxu0 0.0
          %703 = vmatpush.msra.mxu0 0.0
          %704 = vmatpush.msra.mxu0 0.0
          %705 = vmatpush.msra.mxu0 0.0
          %706 = vmatpush.msra.mxu0 0.0
          %707 = vmatpush.msra.mxu0 0.0
          %708 = vmatpush.msra.mxu0 0.0
          %709 = vmatpush.msra.mxu0 0.0
          %710 = vmatpush.msra.mxu0 0.0
          %711 = vmatpush.msra.mxu0 %v670
          %712 = vmatpush.msra.mxu0 %v669
          %713 = vmatpush.msra.mxu0 %v668
          %714 = vmatpush.msra.mxu0 %v667
          %715 = vmatmul.f32.gmra.mxu0 %v428
          %v716 = vpop.f32.mrf.mxu0
          %v717 = vadd.f32 %v694, %v716
          %718 = vmatmul.f32.gmra.mxu0 %v431
          %v719 = vpop.f32.mrf.mxu0
          %v720 = vadd.f32 %v697, %v719
          %721 = vdwg.mxu0
          %s722 = scalar_lea.vmem %s4, 3
          %v723 = vld [vmem:[%s722] sm:$0x1]
          %v725 = vperm.slane %v723, 0
          %v727 = vadd.f32 %v717, %v725
          %v728 = vadd.f32 %v720, %v725
          %v729 = vxor.u32 %v727, 2147483648
          %v730 = vxor.u32 %v728, 2147483648
          %v731 = vmul.f32 %v729, 1.442695
          %v732 = vpow.pop %v731
          %v733 = vmul.f32 %v730, 1.442695
          %v734 = vpow.pop %v733
          %v735 = vadd.f32 %v732, 1.0
          %v736 = vadd.f32 %v734, 1.0
          %v737 = vrcp.pop %v735
          %v738 = vmul.f32 %v735, %v737
          %v739 = vsub.f32 1.0, %v738
          %v740 = vmul.f32 %v737, %v739
          %v741 = vadd.f32 %v737, %v740
          %vm742 = vweird.f32 %v735
          %vm743 = vweird.f32 %v737
          %vm744 = vmor %vm742, %vm743
          %v745 = vsel %vm744, %v737, %v741
          %v746 = vand.u32 2147483647, %v735
          %vm747 = vcmp.eq.f32.partialorder %v746, 8.507059e+37
          %v748 = vand.u32 %v735, 2147483648
          %v749 = vor.u32 1.1754944e-38, %v748
          %v750 = vsel %vm747, %v749, %v745
          %v751 = vmul.f32 1.0, %v750
          %v752 = vrcp.pop %v736
          %v753 = vmul.f32 %v736, %v752
          %v754 = vsub.f32 1.0, %v753
          %v755 = vmul.f32 %v752, %v754
          %v756 = vadd.f32 %v752, %v755
          %vm757 = vweird.f32 %v736
          %vm758 = vweird.f32 %v752
          %vm759 = vmor %vm757, %vm758
          %v760 = vsel %vm759, %v752, %v756
          %v761 = vand.u32 2147483647, %v736
          %vm762 = vcmp.eq.f32.partialorder %v761, 8.507059e+37
          %v763 = vand.u32 %v736, 2147483648
          %v764 = vor.u32 1.1754944e-38, %v763
          %v765 = vsel %vm762, %v764, %v760
          %v766 = vmul.f32 1.0, %v765
          %v767 = vmul.f32 %v585, %v385
          %v768 = vmul.f32 %v600, %v386
          %v769 = vmul.f32 %v484, %v664
          %v770 = vmul.f32 %v499, %v665
          %v771 = vadd.f32 %v767, %v769
          %v772 = vadd.f32 %v768, %v770
          %v773 = vtanh.pop %v771
          %v774 = vtanh.pop %v772
          %v775 = vmul.f32 %v751, %v773
          %v776 = vmul.f32 %v766, %v774
          %777 = vst.msk [vmem:[#allocation3] sm:$0xff] %vm397, %v771
          %778 = vst.msk [vmem:[#allocation3 + $0x8] sm:$0xff] %vm397, %v772
          %779 = vst.msk [vmem:[#allocation2] sm:$0xff] %vm397, %v775
          %780 = vst.msk [vmem:[#allocation2 + $0x8] sm:$0xff] %vm397, %v776
          %v781 = vpack.c.bf16 %v775, %v775
          %v782 = vpack.c.bf16 %v776, %v776
          %vm783 = vcmask 257024
          %784 = vst.msk [vmem:[#allocation4] sm:$0xf] %vm783, %v781
          %785 = vst.msk [vmem:[#allocation4 + $0x4] sm:$0xf] %vm783, %v782
          %vm786 = vcmask 7168
          %787 = vst.msk [vmem:[#allocation6] sm:$0xff] %vm786, -1e+30
          %788 = vst.msk [vmem:[#allocation6 + $0x8] sm:$0xff] %vm786, -1e+30
          %789 = vst.msk [vmem:[#allocation7] sm:$0xff] %vm786, 0.0
          %790 = vst.msk [vmem:[#allocation7 + $0x8] sm:$0xff] %vm786, 0.0
          %791 = vst.msk [vmem:[#allocation8] sm:$0xff] %vm397, 0.0
          %792 = vst.msk [vmem:[#allocation8 + $0x8] sm:$0xff] %vm397, 0.0
        $region68: #{tpu_custom_call.1} parent=51 // pred_fallthru
          _
        %v793 = vld [vmem:[#allocation4] sm:$0xf]
        %v794 = vld [vmem:[#allocation4 + $0x4] sm:$0xf]
        %v795 = vld [vmem:[%s361] sm:$0xf]
        %v796 = vld [vmem:[%s361 + $0x4] sm:$0xf]
        %v797 = vld [vmem:[%s361 + $0x8] sm:$0xf]
        %v798 = vld [vmem:[%s361 + $0xc] sm:$0xf]
        %v799 = vld [vmem:[%s361 + $0x10] sm:$0xf]
        %v800 = vld [vmem:[%s361 + $0x14] sm:$0xf]
        %v801 = vld [vmem:[%s361 + $0x18] sm:$0xf]
        %v802 = vld [vmem:[%s361 + $0x1c] sm:$0xf]
        %v803 = vld [vmem:[%s361 + $0x20] sm:$0xf]
        %v804 = vld [vmem:[%s361 + $0x24] sm:$0xf]
        %v805 = vld [vmem:[%s361 + $0x28] sm:$0xf]
        %v806 = vld [vmem:[%s361 + $0x2c] sm:$0xf]
        %v807 = vld [vmem:[%s361 + $0x30] sm:$0xf]
        %v808 = vld [vmem:[%s361 + $0x34] sm:$0xf]
        %v809 = vld [vmem:[%s361 + $0x38] sm:$0xf]
        %v810 = vld [vmem:[%s361 + $0x3c] sm:$0xf]
        %v813 = vunpack.c.l.b16 %v793
        %v814 = vunpack.c.l.b16 %v794
        %v815 = vpack.c.b16 %v814, %v813
        %v832 = vunpack.c.l.b16 %v795
        %v833 = vunpack.c.l.b16 %v796
        %v834 = vunpack.c.l.b16 %v797
        %v835 = vunpack.c.l.b16 %v798
        %v836 = vunpack.c.l.b16 %v799
        %v837 = vunpack.c.l.b16 %v800
        %v838 = vunpack.c.l.b16 %v801
        %v839 = vunpack.c.l.b16 %v802
        %v840 = vunpack.c.l.b16 %v803
        %v841 = vunpack.c.l.b16 %v804
        %v842 = vunpack.c.l.b16 %v805
        %v843 = vunpack.c.l.b16 %v806
        %v844 = vunpack.c.l.b16 %v807
        %v845 = vunpack.c.l.b16 %v808
        %v846 = vunpack.c.l.b16 %v809
        %v847 = vunpack.c.l.b16 %v810
        %v848 = vpack.c.b16 %v833, %v832
        %v849 = vpack.c.b16 %v835, %v834
        %v850 = vpack.c.b16 %v837, %v836
        %v851 = vpack.c.b16 %v839, %v838
        %v852 = vpack.c.b16 %v841, %v840
        %v853 = vpack.c.b16 %v843, %v842
        %v854 = vpack.c.b16 %v845, %v844
        %v855 = vpack.c.b16 %v847, %v846
        %vm856 = vcmask 261120
        %v858 = vsel %vm856, %v815, 0
        %v861 = vsel %vm856, %v848, 0
        %v864 = vsel %vm856, %v849, 0
        %v867 = vsel %vm856, %v850, 0
        %v870 = vsel %vm856, %v851, 0
        %v873 = vsel %vm856, %v852, 0
        %v876 = vsel %vm856, %v853, 0
        %v879 = vsel %vm856, %v854, 0
        %v882 = vsel %vm856, %v855, 0
        %884 = vmatpush.bf16.xpose.msra.mxu0 %v882
        %885 = vmatpush.bf16.xpose.msra.mxu0 %v879
        %886 = vmatpush.bf16.xpose.msra.mxu0 %v876
        %887 = vmatpush.bf16.xpose.msra.mxu0 %v873
        %888 = vmatpush.bf16.xpose.msra.mxu0 %v870
        %889 = vmatpush.bf16.xpose.msra.mxu0 %v867
        %890 = vmatpush.bf16.xpose.msra.mxu0 %v864
        %891 = vmatpush.bf16.xpose.msra.mxu0 %v861
        %892 = vmatmul.bf16.gmra.mxu0 %v858
        %v893 = vpop.f32.mrf.mxu0
        %v894 = vadd.f32 0.0, %v893
        %v895 = vpop.f32.mrf.mxu0
        %v896 = vadd.f32 0.0, %v895
        %897 = vdwg.mxu0
        %s898 = smul.u32 %s27, 16
        %v899 = vlaneseq
        %v900 = vshrl.u32 %v899, 7
        %v901 = vadd.s32 %v900, 8
        %v902 = vstv %s898
        %v903 = vadd.s32 %v900, %v902
        %v904 = vadd.s32 %v901, %v902
        %v905 = vld [vmem:[%s365] sm:$0x1]
        %v906 = vperm.slane %v905, 0
        %vm907 = vcmp.eq.s32.totalorder %v906, %v903
        %vm908 = vcmp.eq.s32.totalorder %v906, %v904
        %v909 = vsel %vm907, %v894, -1e+30
        %v910 = vsel %vm908, %v896, -1e+30
        %911 = vmax.xlane.f32.xlu0 %v909
        %v912 = vpop.xlane.xlu0 %911
        %913 = vmax.xlane.f32.xlu0 %v910
        %v914 = vpop.xlane.xlu0 %913
        %v915 = vld [vmem:[#allocation6] sm:$0xff]
        %v916 = vld [vmem:[#allocation6 + $0x8] sm:$0xff]
        %v917 = vmax.f32 %v915, %v912
        %v918 = vmax.f32 %v916, %v914
        %v919 = vsub.f32 %v915, %v917
        %v920 = vsub.f32 %v916, %v918
        %v921 = vmul.f32 %v919, 1.442695
        %v922 = vpow.pop %v921
        %v923 = vmul.f32 %v920, 1.442695
        %v924 = vpow.pop %v923
        %926 = vset.pattern.permute.xlu0 0
        %927 = vperm.xlu0 %926, %v917
        %v928 = vpop.permute.xlu0 %927
        %931 = vset.pattern.permute.xlu0 0
        %932 = vperm.xlu0 %931, %v918
        %v933 = vpop.permute.xlu0 %932
        %v935 = vsub.f32 %v909, %v928
        %v936 = vsub.f32 %v910, %v933
        %v937 = vmul.f32 %v935, 1.442695
        %v938 = vpow.pop %v937
        %v939 = vmul.f32 %v936, 1.442695
        %v940 = vpow.pop %v939
        %v941 = vsel %vm907, %v938, 0.0
        %v942 = vsel %vm908, %v940, 0.0
        %v943 = vld [vmem:[#allocation7] sm:$0xff]
        %v944 = vld [vmem:[#allocation7 + $0x8] sm:$0xff]
        %v945 = vmul.f32 %v922, %v943
        %v946 = vmul.f32 %v924, %v944
        %947 = vadd.xlane.f32.xlu0 %v941
        %v948 = vpop.xlane.xlu0 %947
        %949 = vadd.xlane.f32.xlu0 %v942
        %v950 = vpop.xlane.xlu0 %949
        %v951 = vadd.f32 %v945, %v948
        %v952 = vadd.f32 %v946, %v950
        %vm953 = vcmask 7168
        %954 = vst.msk [vmem:[#allocation7] sm:$0xff] %vm953, %v951
        %955 = vst.msk [vmem:[#allocation7 + $0x8] sm:$0xff] %vm953, %v952
        %v956 = vld [vmem:[#allocation8] sm:$0xff]
        %v957 = vld [vmem:[#allocation8 + $0x8] sm:$0xff]
        %959 = vset.pattern.permute.xlu0 0
        %960 = vperm.xlu0 %959, %v922
        %v961 = vpop.permute.xlu0 %960
        %964 = vset.pattern.permute.xlu0 0
        %965 = vperm.xlu0 %964, %v924
        %v966 = vpop.permute.xlu0 %965
        %v968 = vmul.f32 %v961, %v956
        %v969 = vmul.f32 %v966, %v957
        %v970 = vpack.c.bf16 %v942, %v941
        %979 = vmatpush.bf16.msra.mxu0 %v855
        %980 = vmatpush.bf16.msra.mxu0 %v854
        %981 = vmatpush.bf16.msra.mxu0 %v853
        %982 = vmatpush.bf16.msra.mxu0 %v852
        %983 = vmatpush.bf16.msra.mxu0 %v851
        %984 = vmatpush.bf16.msra.mxu0 %v850
        %985 = vmatpush.bf16.msra.mxu0 %v849
        %986 = vmatpush.bf16.msra.mxu0 %v848
        %987 = vmatmul.bf16.gmra.mxu0 %v970
        %v988 = vpop.f32.mrf.mxu0
        %v989 = vadd.f32 0.0, %v988
        %v990 = vpop.f32.mrf.mxu0
        %v991 = vadd.f32 0.0, %v990
        %992 = vdwg.mxu0
        %v993 = vadd.f32 %v968, %v989
        %v994 = vadd.f32 %v969, %v991
        %995 = vst.msk [vmem:[#allocation8] sm:$0xff] %vm856, %v993
        %996 = vst.msk [vmem:[#allocation8 + $0x8] sm:$0xff] %vm856, %v994
        %997 = vst.msk [vmem:[#allocation6] sm:$0xff] %vm953, %v917
        %998 = vst.msk [vmem:[#allocation6 + $0x8] sm:$0xff] %vm953, %v918
        // Predicated region
        $region69: #{tpu_custom_call.1} parent=51 // pred_check
          %p999 = pneg %p368
        $region70: #{tpu_custom_call.1} parent=51 // pred_check_branch
          %1001 = sbr.rel (%p999) target = $region72
        $region71: #{tpu_custom_call.1} parent=51 // pred_region
          %v1002 = vld [vmem:[#allocation7] sm:$0xff]
          %v1003 = vld [vmem:[#allocation7 + $0x8] sm:$0xff]
          %v1004 = vadd.f32 %v1002, 1e-06
          %v1005 = vadd.f32 %v1003, 1e-06
          %v1006 = vrcp.pop %v1004
          %v1007 = vrcp.pop %v1005
          %v1008 = vld [vmem:[#allocation8] sm:$0xff]
          %v1009 = vld [vmem:[#allocation8 + $0x8] sm:$0xff]
          %1011 = vset.pattern.permute.xlu0 0
          %1012 = vperm.xlu0 %1011, %v1006
          %v1013 = vpop.permute.xlu0 %1012
          %1016 = vset.pattern.permute.xlu0 0
          %1017 = vperm.xlu0 %1016, %v1007
          %v1018 = vpop.permute.xlu0 %1017
          %v1020 = vmul.f32 %v1008, %v1013
          %v1021 = vmul.f32 %v1009, %v1018
          %1022 = vst.msk [vmem:[#allocation5] sm:$0xff] %vm856, %v1020
          %1023 = vst.msk [vmem:[#allocation5 + $0x8] sm:$0xff] %vm856, %v1021
        $region72: #{tpu_custom_call.1} parent=51 // pred_fallthru
          _
        %p1024 = scmp.eq.s32.totalorder %s28, 3
        %p1025 = pnand %p1024, %p368
        %p1026 = pneg %p1025
        // Predicated region
        $region73: #{tpu_custom_call.1} parent=51 // pred_check
          _
        $region74: #{tpu_custom_call.1} parent=51 // pred_check_branch
          %1028 = sbr.rel (%p1025) target = $region76
        $region75: #{tpu_custom_call.1} parent=51 // pred_region
          %v1029 = vld [vmem:[#allocation2] sm:$0xff]
          %v1030 = vld [vmem:[#allocation2 + $0x8] sm:$0xff]
          %v1031 = vld [vmem:[%s5] sm:$0xff]
          %v1032 = vld [vmem:[%s5 + $0x8] sm:$0xff]
          %v1033 = vld [vmem:[%s5 + $0x10] sm:$0xff]
          %v1034 = vld [vmem:[%s5 + $0x18] sm:$0xff]
          %v1035 = vld [vmem:[#allocation5] sm:$0xff]
          %v1036 = vld [vmem:[#allocation5 + $0x8] sm:$0xff]
          %v1037 = vld [vmem:[%s6] sm:$0xff]
          %v1038 = vld [vmem:[%s6 + $0x8] sm:$0xff]
          %v1039 = vld [vmem:[%s6 + $0x10] sm:$0xff]
          %v1040 = vld [vmem:[%s6 + $0x18] sm:$0xff]
          %v1042 = vsel %vm856, %v1035, 0
          %v1045 = vsel %vm856, %v1036, 0
          %1047 = vmatpush.msra.mxu0 0.0
          %1048 = vmatpush.msra.mxu0 0.0
          %1049 = vmatpush.msra.mxu0 0.0
          %1050 = vmatpush.msra.mxu0 0.0
          %1051 = vmatpush.msra.mxu0 0.0
          %1052 = vmatpush.msra.mxu0 0.0
          %1053 = vmatpush.msra.mxu0 0.0
          %1054 = vmatpush.msra.mxu0 0.0
          %1055 = vmatpush.msra.mxu0 0.0
          %1056 = vmatpush.msra.mxu0 0.0
          %1057 = vmatpush.msra.mxu0 0.0
          %1058 = vmatpush.msra.mxu0 0.0
          %1059 = vmatpush.msra.mxu0 %v1040
          %1060 = vmatpush.msra.mxu0 %v1039
          %1061 = vmatpush.msra.mxu0 %v1038
          %1062 = vmatpush.msra.mxu0 %v1037
          %1063 = vmatmul.f32.gmra.mxu0 %v1042
          %v1064 = vpop.f32.mrf.mxu0
          %v1065 = vadd.f32 0.0, %v1064
          %1066 = vmatmul.f32.gmra.mxu0 %v1045
          %v1067 = vpop.f32.mrf.mxu0
          %v1068 = vadd.f32 0.0, %v1067
          %1069 = vdwg.mxu0
          %v1071 = vsel %vm856, %v1029, 0
          %v1074 = vsel %vm856, %v1030, 0
          %1076 = vmatpush.msra.mxu0 0.0
          %1077 = vmatpush.msra.mxu0 0.0
          %1078 = vmatpush.msra.mxu0 0.0
          %1079 = vmatpush.msra.mxu0 0.0
          %1080 = vmatpush.msra.mxu0 0.0
          %1081 = vmatpush.msra.mxu0 0.0
          %1082 = vmatpush.msra.mxu0 0.0
          %1083 = vmatpush.msra.mxu0 0.0
          %1084 = vmatpush.msra.mxu0 0.0
          %1085 = vmatpush.msra.mxu0 0.0
          %1086 = vmatpush.msra.mxu0 0.0
          %1087 = vmatpush.msra.mxu0 0.0
          %1088 = vmatpush.msra.mxu0 %v1034
          %1089 = vmatpush.msra.mxu0 %v1033
          %1090 = vmatpush.msra.mxu0 %v1032
          %1091 = vmatpush.msra.mxu0 %v1031
          %1092 = vmatmul.f32.gmra.mxu0 %v1071
          %v1093 = vpop.f32.mrf.mxu0
          %v1094 = vadd.f32 %v1065, %v1093
          %1095 = vmatmul.f32.gmra.mxu0 %v1074
          %v1096 = vpop.f32.mrf.mxu0
          %v1097 = vadd.f32 %v1068, %v1096
          %1098 = vdwg.mxu0
          %v1099 = vld [vmem:[%s7] sm:$0x1]
          %v1101 = vperm.slane %v1099, 0
          %v1103 = vadd.f32 %v1094, %v1101
          %v1104 = vadd.f32 %v1097, %v1101
          %1105 = vst [vmem:[#allocation14] sm:$0xff] %v1103
          %1106 = vst [vmem:[#allocation14 + $0x8] sm:$0xff] %v1104
        $region76: #{tpu_custom_call.1} parent=51 // pred_fallthru
          _
        // Predicated region
        $region77: #{tpu_custom_call.1} parent=51 // pred_check
          %p1107 = pneg %p237
        $region78: #{tpu_custom_call.1} parent=51 // pred_check_branch
          %1109 = sbr.rel (%p1107) target = $region80
        $region79: #{tpu_custom_call.1} parent=51 // pred_region
          %s1110 = smul.u32 2, %s27
          %1112 = vsyncadd [#allocation11], 0
          %s1113 = smul.addr %s1110, 8
          %s1114 = scalar_lea.hbm %s8, %s1113
          %s1115 = sshll.u32 [#allocation14], 4
          %s1116 = int_to_ptr.vmem [resolvable:$true] %s1115
          %s1117 = sshll.u32 %s1114, 4
          %s1118 = int_to_ptr.hbm [resolvable:$true] %s1117
          %1123 = dma.vmem_to_hbm [thread:$0]  %s1116, 256, %s1118, [#allocation11], 128, 128, 8
        $region80: #{tpu_custom_call.1} parent=51 // pred_fallthru
          _
        // Predicated region
        $region81: #{tpu_custom_call.1} parent=51 // pred_check
          %p1124 = pneg %p237
        $region82: #{tpu_custom_call.1} parent=51 // pred_check_branch
          %1126 = sbr.rel (%p1124) target = $region84
        $region83: #{tpu_custom_call.1} parent=51 // pred_region
          %1128 = dma.done [#allocation11], 256
        $region84: #{tpu_custom_call.1} parent=51 // pred_fallthru
          _
      $region52: #{tpu_custom_call.1} parent=5 // pred_fallthru
        _
      %p1129 = scmp.le.s32.totalorder 2, %s17
      // Predicated region
      $region85: #{tpu_custom_call.1} parent=5 // pred_check
        %p1130 = pneg %p1129
      $region86: #{tpu_custom_call.1} parent=5 // pred_check_branch
        %1132 = sbr.rel (%p1130) target = $region88
      $region87: #{tpu_custom_call.1} parent=5 // pred_region
        %s1133 = ssub.s32 %s17, 2
      $region88: #{tpu_custom_call.1} parent=5 // pred_fallthru
        _
    $region6: #{tpu_custom_call.1} parent=1 // loop_footer
      %s21 = sadd.s32 1, %s17
    $region7: #{tpu_custom_call.1} parent=1 // loop_footer_branch
      %16 = sbr.rel target = $region3
    $region8: #{tpu_custom_call.1} parent=1 // loop_exit
      _
    %1134 = vsyncpa [#allocation10], 1
    %s1135 = scalar_lea.sflag [#allocation10], 1
    %1136 = vsyncpa %s1135, 1
    %1137 = vsyncpa [#allocation13], 1
    %1138 = vsyncpa [#allocation11], 1
    %s1139 = scalar_lea.sflag [#allocation11], 1
    %1140 = vsyncpa %s1139, 1

</llo_original>
